<compile_context>
chip_gen: v5e
topology: v5e:2x2
jax: 0.10.0
libtpu: 0.0.40
codegen_flags: <defaults>
</compile_context>

<pallas_src>
import math

import jax
import jax.numpy as jnp
from jax.experimental import pallas as pl
from jax.experimental.pallas import tpu as pltpu  # noqa: F401  (kept for TPU-specific tuning hooks)

# ----- small synthetic BERT config -----
VOCAB = 64
HIDDEN = 32
N_LAYERS = 2
N_HEADS = 4
HEAD_DIM = HIDDEN // N_HEADS
INTER = 64
MAX_POS = 16
N_CLASSES = 2
BATCH = 2
SEQ = 8
LN_EPS = 1e-12

_LAYER_WEIGHT_NAMES = ("wq", "bq", "wk", "bk", "wv", "bv", "wo", "bo",
                       "ln1g", "ln1b", "w1", "b1", "w2", "b2", "ln2g", "ln2b")


def _layernorm(x, g, b):
    mu = jnp.mean(x, axis=-1, keepdims=True)
    var = jnp.mean((x - mu) ** 2, axis=-1, keepdims=True)
    return (x - mu) * jax.lax.rsqrt(var + LN_EPS) * g + b


# ---------------- fused Pallas kernel ----------------

def fused_bert_kernel(ids_ref, mask_ref,
                      word_emb_ref, pos_emb_ref, type_emb_ref,
                      emb_ln_g_ref, emb_ln_b_ref,
                      wq_ref, bq_ref, wk_ref, bk_ref, wv_ref, bv_ref,
                      wo_ref, bo_ref, ln1g_ref, ln1b_ref,
                      w1_ref, b1_ref, w2_ref, b2_ref, ln2g_ref, ln2b_ref,
                      wp_ref, bp_ref, wc_ref, bc_ref,
                      o_ref):
    B, S = mask_ref.shape
    N = B * S                      # rows = batch*seq, hidden dim stays on lanes
    V, H = word_emb_ref.shape
    L = wq_ref.shape[0]
    scale = 1.0 / math.sqrt(HEAD_DIM)

    # ---- embeddings: token gather as a one-hot matmul on the MXU ----
    ids = ids_ref[...]                                              # [N, 1] int32
    vocab_iota = jax.lax.broadcasted_iota(jnp.int32, (N, V), 1)
    onehot = jnp.where(vocab_iota == ids, 1.0, 0.0)                 # [N, V] f32
    tok = jnp.dot(onehot, word_emb_ref[...],
                  preferred_element_type=jnp.float32)               # [N, H]
    pos = jnp.tile(pos_emb_ref[...][:S, :], (B, 1))                 # [N, H]
    typ = type_emb_ref[...][0:1, :]                                 # token_type_ids == 0
    x = _layernorm(tok + pos + typ, emb_ln_g_ref[...], emb_ln_b_ref[...])   # [N, H]

    # ---- additive attention bias from [B, S] mask, head-batched: [NH*B, 1, S] ----
    neg = (1.0 - mask_ref[...]) * -1e9                              # [B, S]
    attn_bias = jnp.tile(neg, (N_HEADS, 1))[:, None, :]             # hoisted out of layer loop

    # ---- transformer layers: static loop, all weights VMEM-resident ----
    for l in range(L):
        q = jnp.dot(x, wq_ref[l], preferred_element_type=jnp.float32) + bq_ref[l]
        k = jnp.dot(x, wk_ref[l], preferred_element_type=jnp.float32) + bk_ref[l]
        v = jnp.dot(x, wv_ref[l], preferred_element_type=jnp.float32) + bv_ref[l]

        q3 = q.reshape(B, S, H)
        k3 = k.reshape(B, S, H)
        v3 = v.reshape(B, S, H)
        # fold (head, batch) into one batch dim -> [NH*B, S, D]; head h = lanes [h*D,(h+1)*D)
        qh = jnp.concatenate(
            [q3[:, :, h * HEAD_DIM:(h + 1) * HEAD_DIM] for h in range(N_HEADS)], axis=0)
        kh = jnp.concatenate(
            [k3[:, :, h * HEAD_DIM:(h + 1) * HEAD_DIM] for h in range(N_HEADS)], axis=0)
        vh = jnp.concatenate(
            [v3[:, :, h * HEAD_DIM:(h + 1) * HEAD_DIM] for h in range(N_HEADS)], axis=0)

        # one batched contraction for all heads & batch elements
        s_hb = jnp.einsum('bqd,bkd->bqk', qh, kh,
                          preferred_element_type=jnp.float32) * scale + attn_bias
        s_hb = s_hb - jnp.max(s_hb, axis=-1, keepdims=True)
        p = jnp.exp(s_hb)
        p = p * pl.reciprocal(jnp.sum(p, axis=-1, keepdims=True), approx=True)
        ctx_hb = jnp.einsum('bqk,bkd->bqd', p, vh,
                            preferred_element_type=jnp.float32)     # [NH*B, S, D]
        ctx = jnp.concatenate(
            [ctx_hb[h * B:(h + 1) * B] for h in range(N_HEADS)], axis=-1)  # [B, S, H]
        ctx = ctx.reshape(N, H)

        attn_out = jnp.dot(ctx, wo_ref[l],
                           preferred_element_type=jnp.float32) + bo_ref[l]
        h1 = _layernorm(x + attn_out, ln1g_ref[l], ln1b_ref[l])

        # TODO(synk): HF/PyTorch BERT default is the exact erf GELU; the tanh
        # approximation is kept here for a guaranteed Mosaic lowering (drift ~1e-3).
        ff = jax.nn.gelu(
            jnp.dot(h1, w1_ref[l], preferred_element_type=jnp.float32) + b1_ref[l],
            approximate=True)
        ff_out = jnp.dot(ff, w2_ref[l],
                         preferred_element_type=jnp.float32) + b2_ref[l]
        x = _layernorm(h1 + ff_out, ln2g_ref[l], ln2b_ref[l])

    # ---- pooler: tanh(Linear([CLS])) -> dropout(p=0.3, identity at inference) -> classifier
    cls = x.reshape(B, S, H)[:, 0:1, :].reshape(B, H)
    pooled = jnp.tanh(jnp.dot(cls, wp_ref[...],
                              preferred_element_type=jnp.float32) + bp_ref[...])
    o_ref[...] = jnp.dot(pooled, wc_ref[...],
                         preferred_element_type=jnp.float32) + bc_ref[...]


# ---------------- wrapper ----------------

def fake_news_classifier(params, input_ids, attention_mask):
    B, S = input_ids.shape
    ids2 = input_ids.reshape(B * S, 1).astype(jnp.int32)
    mask_f = attention_mask.astype(jnp.float32)
    args = [ids2, mask_f,
            params["word_emb"], params["pos_emb"], params["type_emb"],
            params["emb_ln_g"], params["emb_ln_b"]]
    args += [params["layers"][name] for name in _LAYER_WEIGHT_NAMES]
    args += [params["wp"], params["bp"], params["wc"], params["bc"]]
    # Single fused call, no grid: every operand is a whole-array VMEM block
    # (total < 200 KB, fits comfortably on v5e/v6e/v7x).
    return pl.pallas_call(
        fused_bert_kernel,
        out_shape=jax.ShapeDtypeStruct((B, N_CLASSES), jnp.float32),
    )(*args)


def init_params(key):
    def dense(k, shape):
        return jax.random.normal(k, shape, jnp.float32) * 0.02

    keys = iter(jax.random.split(key, 32))
    params = {
        "word_emb": dense(next(keys), (VOCAB, HIDDEN)),
        "pos_emb": dense(next(keys), (MAX_POS, HIDDEN)),
        "type_emb": dense(next(keys), (2, HIDDEN)),
        "emb_ln_g": jnp.ones((1, HIDDEN), jnp.float32),
        "emb_ln_b": jnp.zeros((1, HIDDEN), jnp.float32),
        "wp": dense(next(keys), (HIDDEN, HIDDEN)),
        "bp": jnp.zeros((1, HIDDEN), jnp.float32),
        "wc": dense(next(keys), (HIDDEN, N_CLASSES)),
        "bc": jnp.zeros((1, N_CLASSES), jnp.float32),
    }
    # Per-layer weights stacked on a leading layer axis so the fused kernel can loop in-VMEM.
    per_layer_shapes = {
        "wq": (HIDDEN, HIDDEN), "bq": (1, HIDDEN),
        "wk": (HIDDEN, HIDDEN), "bk": (1, HIDDEN),
        "wv": (HIDDEN, HIDDEN), "bv": (1, HIDDEN),
        "wo": (HIDDEN, HIDDEN), "bo": (1, HIDDEN),
        "ln1g": (1, HIDDEN), "ln1b": (1, HIDDEN),
        "w1": (HIDDEN, INTER), "b1": (1, INTER),
        "w2": (INTER, HIDDEN), "b2": (1, HIDDEN),
        "ln2g": (1, HIDDEN), "ln2b": (1, HIDDEN),
    }
    stacked = {}
    for name in _LAYER_WEIGHT_NAMES:
        shape = (N_LAYERS,) + per_layer_shapes[name]
        if name.startswith("w"):
            stacked[name] = dense(next(keys), shape)
        elif name in ("ln1g", "ln2g"):
            stacked[name] = jnp.ones(shape, jnp.float32)
        else:
            stacked[name] = jnp.zeros(shape, jnp.float32)
    params["layers"] = stacked
    return params


if __name__ == "__main__":
    key = jax.random.PRNGKey(0)
    pkey, ikey = jax.random.split(key)
    params = init_params(pkey)

    input_ids = jax.random.randint(ikey, (BATCH, SEQ), 0, VOCAB, dtype=jnp.int32)
    attention_mask = jnp.ones((BATCH, SEQ), dtype=jnp.int32).at[:, SEQ - 2:].set(0)

    logits = fake_news_classifier(params, input_ids, attention_mask)
    jax.block_until_ready(logits)
    assert logits.shape == (BATCH, N_CLASSES)
    print("KERNEL_OK")
</pallas_src>

<mosaic_0001>
module attributes {stable_mosaic.version = 11 : i64} {
  func.func @fused_bert_kernel(%arg0: memref<16x1xi32, #tpu.memory_space<vmem>>, %arg1: memref<2x8xf32, #tpu.memory_space<vmem>>, %arg2: memref<64x32xf32, #tpu.memory_space<vmem>>, %arg3: memref<16x32xf32, #tpu.memory_space<vmem>>, %arg4: memref<2x32xf32, #tpu.memory_space<vmem>>, %arg5: memref<1x32xf32, #tpu.memory_space<vmem>>, %arg6: memref<1x32xf32, #tpu.memory_space<vmem>>, %arg7: memref<2x32x32xf32, #tpu.memory_space<vmem>>, %arg8: memref<2x1x32xf32, #tpu.memory_space<vmem>>, %arg9: memref<2x32x32xf32, #tpu.memory_space<vmem>>, %arg10: memref<2x1x32xf32, #tpu.memory_space<vmem>>, %arg11: memref<2x32x32xf32, #tpu.memory_space<vmem>>, %arg12: memref<2x1x32xf32, #tpu.memory_space<vmem>>, %arg13: memref<2x32x32xf32, #tpu.memory_space<vmem>>, %arg14: memref<2x1x32xf32, #tpu.memory_space<vmem>>, %arg15: memref<2x1x32xf32, #tpu.memory_space<vmem>>, %arg16: memref<2x1x32xf32, #tpu.memory_space<vmem>>, %arg17: memref<2x32x64xf32, #tpu.memory_space<vmem>>, %arg18: memref<2x1x64xf32, #tpu.memory_space<vmem>>, %arg19: memref<2x64x32xf32, #tpu.memory_space<vmem>>, %arg20: memref<2x1x32xf32, #tpu.memory_space<vmem>>, %arg21: memref<2x1x32xf32, #tpu.memory_space<vmem>>, %arg22: memref<2x1x32xf32, #tpu.memory_space<vmem>>, %arg23: memref<32x32xf32, #tpu.memory_space<vmem>>, %arg24: memref<1x32xf32, #tpu.memory_space<vmem>>, %arg25: memref<32x2xf32, #tpu.memory_space<vmem>>, %arg26: memref<1x2xf32, #tpu.memory_space<vmem>>, %arg27: memref<2x2xf32, #tpu.memory_space<vmem>>) attributes {dimension_semantics = [], scalar_prefetch = 0 : i64, scratch_operands = 0 : i64, tpu.core_type = #tpu.core_type<tc>} {
    %c0 = arith.constant 0 : index
    %c0_0 = arith.constant 0 : index
    %0 = vector.load %arg0[%c0, %c0_0] : memref<16x1xi32, #tpu.memory_space<vmem>>, vector<16x1xi32>
    %1 = tpu.iota {dimensions = array<i32: 1>} : vector<16x64xi32>
    %2 = vector.broadcast %0 : vector<16x1xi32> to vector<16x64xi32>
    %3 = arith.cmpi eq, %1, %2 : vector<16x64xi32>
    %cst = arith.constant 1.000000e+00 : f32
    %cst_1 = arith.constant 0.000000e+00 : f32
    %4 = vector.broadcast %cst : f32 to vector<16x64xf32>
    %5 = vector.broadcast %cst_1 : f32 to vector<16x64xf32>
    %6 = arith.select %3, %4, %5 : vector<16x64xi1>, vector<16x64xf32>
    %c0_2 = arith.constant 0 : index
    %c0_3 = arith.constant 0 : index
    %7 = vector.load %arg2[%c0_2, %c0_3] : memref<64x32xf32, #tpu.memory_space<vmem>>, vector<64x32xf32>
    %cst_4 = arith.constant dense<0.000000e+00> : vector<16x32xf32>
    %8 = tpu.matmul %6, %7, %cst_4 {dimension_numbers = #tpu.dot_dimension_numbers<[1], [0], [0], [1], [0, 0, 1, 1], [], []>} : vector<16x64xf32>, vector<64x32xf32>, vector<16x32xf32> -> vector<16x32xf32>
    %c0_5 = arith.constant 0 : index
    %c0_6 = arith.constant 0 : index
    %9 = vector.load %arg3[%c0_5, %c0_6] : memref<16x32xf32, #tpu.memory_space<vmem>>, vector<16x32xf32>
    %10 = vector.extract_strided_slice %9 {offsets = [0, 0], sizes = [8, 32], strides = [1, 1]} : vector<16x32xf32> to vector<8x32xf32>
    %11 = tpu.concatenate %10, %10 in 0 : vector<8x32xf32>, vector<8x32xf32> -> vector<16x32xf32>
    %c0_7 = arith.constant 0 : index
    %c0_8 = arith.constant 0 : index
    %12 = vector.load %arg4[%c0_7, %c0_8] : memref<2x32xf32, #tpu.memory_space<vmem>>, vector<2x32xf32>
    %13 = vector.extract_strided_slice %12 {offsets = [0, 0], sizes = [1, 32], strides = [1, 1]} : vector<2x32xf32> to vector<1x32xf32>
    %14 = arith.addf %8, %11 : vector<16x32xf32>
    %15 = vector.broadcast %13 : vector<1x32xf32> to vector<16x32xf32>
    %16 = arith.addf %14, %15 : vector<16x32xf32>
    %c0_9 = arith.constant 0 : index
    %c0_10 = arith.constant 0 : index
    %17 = vector.load %arg5[%c0_9, %c0_10] : memref<1x32xf32, #tpu.memory_space<vmem>>, vector<1x32xf32>
    %c0_11 = arith.constant 0 : index
    %c0_12 = arith.constant 0 : index
    %18 = vector.load %arg6[%c0_11, %c0_12] : memref<1x32xf32, #tpu.memory_space<vmem>>, vector<1x32xf32>
    %cst_13 = arith.constant dense<0.000000e+00> : vector<16xf32>
    %19 = vector.multi_reduction <add>, %16, %cst_13 [1] : vector<16x32xf32> to vector<16xf32>
    %20 = vector.shape_cast %19 : vector<16xf32> to vector<16x1xf32>
    %cst_14 = arith.constant 3.200000e+01 : f32
    %21 = vector.broadcast %cst_14 : f32 to vector<16x1xf32>
    %22 = arith.divf %20, %21 : vector<16x1xf32>
    %23 = vector.broadcast %22 : vector<16x1xf32> to vector<16x32xf32>
    %24 = arith.subf %16, %23 : vector<16x32xf32>
    %25 = arith.mulf %24, %24 : vector<16x32xf32>
    %cst_15 = arith.constant dense<0.000000e+00> : vector<16xf32>
    %26 = vector.multi_reduction <add>, %25, %cst_15 [1] : vector<16x32xf32> to vector<16xf32>
    %27 = vector.shape_cast %26 : vector<16xf32> to vector<16x1xf32>
    %cst_16 = arith.constant 3.200000e+01 : f32
    %28 = vector.broadcast %cst_16 : f32 to vector<16x1xf32>
    %29 = arith.divf %27, %28 : vector<16x1xf32>
    %30 = vector.broadcast %22 : vector<16x1xf32> to vector<16x32xf32>
    %31 = arith.subf %16, %30 : vector<16x32xf32>
    %cst_17 = arith.constant 9.99999996E-13 : f32
    %32 = vector.broadcast %cst_17 : f32 to vector<16x1xf32>
    %33 = arith.addf %29, %32 : vector<16x1xf32>
    %34 = math.rsqrt %33 : vector<16x1xf32>
    %35 = vector.broadcast %34 : vector<16x1xf32> to vector<16x32xf32>
    %36 = arith.mulf %31, %35 : vector<16x32xf32>
    %37 = vector.broadcast %17 : vector<1x32xf32> to vector<16x32xf32>
    %38 = arith.mulf %36, %37 : vector<16x32xf32>
    %39 = vector.broadcast %18 : vector<1x32xf32> to vector<16x32xf32>
    %40 = arith.addf %38, %39 : vector<16x32xf32>
    %c0_18 = arith.constant 0 : index
    %c0_19 = arith.constant 0 : index
    %41 = vector.load %arg1[%c0_18, %c0_19] : memref<2x8xf32, #tpu.memory_space<vmem>>, vector<2x8xf32>
    %cst_20 = arith.constant 1.000000e+00 : f32
    %42 = vector.broadcast %cst_20 : f32 to vector<2x8xf32>
    %43 = arith.subf %42, %41 : vector<2x8xf32>
    %cst_21 = arith.constant -1.000000e+09 : f32
    %44 = vector.broadcast %cst_21 : f32 to vector<2x8xf32>
    %45 = arith.mulf %43, %44 : vector<2x8xf32>
    %46 = tpu.concatenate %45, %45, %45, %45 in 0 : vector<2x8xf32>, vector<2x8xf32>, vector<2x8xf32>, vector<2x8xf32> -> vector<8x8xf32>
    %47 = vector.shape_cast %46 : vector<8x8xf32> to vector<8x1x8xf32>
    %c0_22 = arith.constant 0 : index
    %c0_23 = arith.constant 0 : index
    %c0_24 = arith.constant 0 : index
    %48 = vector.load %arg7[%c0_22, %c0_23, %c0_24] : memref<2x32x32xf32, #tpu.memory_space<vmem>>, vector<1x32x32xf32>
    %49 = vector.shape_cast %48 : vector<1x32x32xf32> to vector<32x32xf32>
    %cst_25 = arith.constant dense<0.000000e+00> : vector<16x32xf32>
    %50 = tpu.matmul %40, %49, %cst_25 {dimension_numbers = #tpu.dot_dimension_numbers<[1], [0], [0], [1], [0, 0, 1, 1], [], []>} : vector<16x32xf32>, vector<32x32xf32>, vector<16x32xf32> -> vector<16x32xf32>
    %c0_26 = arith.constant 0 : index
    %c0_27 = arith.constant 0 : index
    %c0_28 = arith.constant 0 : index
    %51 = vector.load %arg8[%c0_26, %c0_27, %c0_28] : memref<2x1x32xf32, #tpu.memory_space<vmem>>, vector<1x1x32xf32>
    %52 = vector.shape_cast %51 : vector<1x1x32xf32> to vector<1x32xf32>
    %53 = vector.broadcast %52 : vector<1x32xf32> to vector<16x32xf32>
    %54 = arith.addf %50, %53 : vector<16x32xf32>
    %c0_29 = arith.constant 0 : index
    %c0_30 = arith.constant 0 : index
    %c0_31 = arith.constant 0 : index
    %55 = vector.load %arg9[%c0_29, %c0_30, %c0_31] : memref<2x32x32xf32, #tpu.memory_space<vmem>>, vector<1x32x32xf32>
    %56 = vector.shape_cast %55 : vector<1x32x32xf32> to vector<32x32xf32>
    %cst_32 = arith.constant dense<0.000000e+00> : vector<16x32xf32>
    %57 = tpu.matmul %40, %56, %cst_32 {dimension_numbers = #tpu.dot_dimension_numbers<[1], [0], [0], [1], [0, 0, 1, 1], [], []>} : vector<16x32xf32>, vector<32x32xf32>, vector<16x32xf32> -> vector<16x32xf32>
    %c0_33 = arith.constant 0 : index
    %c0_34 = arith.constant 0 : index
    %c0_35 = arith.constant 0 : index
    %58 = vector.load %arg10[%c0_33, %c0_34, %c0_35] : memref<2x1x32xf32, #tpu.memory_space<vmem>>, vector<1x1x32xf32>
    %59 = vector.shape_cast %58 : vector<1x1x32xf32> to vector<1x32xf32>
    %60 = vector.broadcast %59 : vector<1x32xf32> to vector<16x32xf32>
    %61 = arith.addf %57, %60 : vector<16x32xf32>
    %c0_36 = arith.constant 0 : index
    %c0_37 = arith.constant 0 : index
    %c0_38 = arith.constant 0 : index
    %62 = vector.load %arg11[%c0_36, %c0_37, %c0_38] : memref<2x32x32xf32, #tpu.memory_space<vmem>>, vector<1x32x32xf32>
    %63 = vector.shape_cast %62 : vector<1x32x32xf32> to vector<32x32xf32>
    %cst_39 = arith.constant dense<0.000000e+00> : vector<16x32xf32>
    %64 = tpu.matmul %40, %63, %cst_39 {dimension_numbers = #tpu.dot_dimension_numbers<[1], [0], [0], [1], [0, 0, 1, 1], [], []>} : vector<16x32xf32>, vector<32x32xf32>, vector<16x32xf32> -> vector<16x32xf32>
    %c0_40 = arith.constant 0 : index
    %c0_41 = arith.constant 0 : index
    %c0_42 = arith.constant 0 : index
    %65 = vector.load %arg12[%c0_40, %c0_41, %c0_42] : memref<2x1x32xf32, #tpu.memory_space<vmem>>, vector<1x1x32xf32>
    %66 = vector.shape_cast %65 : vector<1x1x32xf32> to vector<1x32xf32>
    %67 = vector.broadcast %66 : vector<1x32xf32> to vector<16x32xf32>
    %68 = arith.addf %64, %67 : vector<16x32xf32>
    %69 = vector.shape_cast %54 : vector<16x32xf32> to vector<2x8x32xf32>
    %70 = vector.shape_cast %61 : vector<16x32xf32> to vector<2x8x32xf32>
    %71 = vector.shape_cast %68 : vector<16x32xf32> to vector<2x8x32xf32>
    %72 = vector.extract_strided_slice %69 {offsets = [0, 0, 0], sizes = [2, 8, 8], strides = [1, 1, 1]} : vector<2x8x32xf32> to vector<2x8x8xf32>
    %73 = vector.extract_strided_slice %69 {offsets = [0, 0, 8], sizes = [2, 8, 8], strides = [1, 1, 1]} : vector<2x8x32xf32> to vector<2x8x8xf32>
    %74 = vector.extract_strided_slice %69 {offsets = [0, 0, 16], sizes = [2, 8, 8], strides = [1, 1, 1]} : vector<2x8x32xf32> to vector<2x8x8xf32>
    %75 = vector.extract_strided_slice %69 {offsets = [0, 0, 24], sizes = [2, 8, 8], strides = [1, 1, 1]} : vector<2x8x32xf32> to vector<2x8x8xf32>
    %76 = tpu.concatenate %72, %73, %74, %75 in 0 : vector<2x8x8xf32>, vector<2x8x8xf32>, vector<2x8x8xf32>, vector<2x8x8xf32> -> vector<8x8x8xf32>
    %77 = vector.extract_strided_slice %70 {offsets = [0, 0, 0], sizes = [2, 8, 8], strides = [1, 1, 1]} : vector<2x8x32xf32> to vector<2x8x8xf32>
    %78 = vector.extract_strided_slice %70 {offsets = [0, 0, 8], sizes = [2, 8, 8], strides = [1, 1, 1]} : vector<2x8x32xf32> to vector<2x8x8xf32>
    %79 = vector.extract_strided_slice %70 {offsets = [0, 0, 16], sizes = [2, 8, 8], strides = [1, 1, 1]} : vector<2x8x32xf32> to vector<2x8x8xf32>
    %80 = vector.extract_strided_slice %70 {offsets = [0, 0, 24], sizes = [2, 8, 8], strides = [1, 1, 1]} : vector<2x8x32xf32> to vector<2x8x8xf32>
    %81 = tpu.concatenate %77, %78, %79, %80 in 0 : vector<2x8x8xf32>, vector<2x8x8xf32>, vector<2x8x8xf32>, vector<2x8x8xf32> -> vector<8x8x8xf32>
    %82 = vector.extract_strided_slice %71 {offsets = [0, 0, 0], sizes = [2, 8, 8], strides = [1, 1, 1]} : vector<2x8x32xf32> to vector<2x8x8xf32>
    %83 = vector.extract_strided_slice %71 {offsets = [0, 0, 8], sizes = [2, 8, 8], strides = [1, 1, 1]} : vector<2x8x32xf32> to vector<2x8x8xf32>
    %84 = vector.extract_strided_slice %71 {offsets = [0, 0, 16], sizes = [2, 8, 8], strides = [1, 1, 1]} : vector<2x8x32xf32> to vector<2x8x8xf32>
    %85 = vector.extract_strided_slice %71 {offsets = [0, 0, 24], sizes = [2, 8, 8], strides = [1, 1, 1]} : vector<2x8x32xf32> to vector<2x8x8xf32>
    %86 = tpu.concatenate %82, %83, %84, %85 in 0 : vector<2x8x8xf32>, vector<2x8x8xf32>, vector<2x8x8xf32>, vector<2x8x8xf32> -> vector<8x8x8xf32>
    "tpu.trace_start"() <{level = 10 : i32, message = "bqd,bkd->bqk"}> : () -> ()
    %cst_43 = arith.constant dense<0.000000e+00> : vector<8x8x8xf32>
    %87 = tpu.matmul %76, %81, %cst_43 {dimension_numbers = #tpu.dot_dimension_numbers<[2], [2], [1], [1], [0, 0, 0, 1, 1, 1], [0], [0]>} : vector<8x8x8xf32>, vector<8x8x8xf32>, vector<8x8x8xf32> -> vector<8x8x8xf32>
    "tpu.trace_stop"() : () -> ()
    %cst_44 = arith.constant 0.353553385 : f32
    %88 = vector.broadcast %cst_44 : f32 to vector<8x8x8xf32>
    %89 = arith.mulf %87, %88 : vector<8x8x8xf32>
    %90 = vector.broadcast %47 : vector<8x1x8xf32> to vector<8x8x8xf32>
    %91 = arith.addf %89, %90 : vector<8x8x8xf32>
    %cst_45 = arith.constant dense<0xFF800000> : vector<8x8xf32>
    %92 = vector.multi_reduction <maximumf>, %91, %cst_45 [2] : vector<8x8x8xf32> to vector<8x8xf32>
    %93 = vector.shape_cast %92 : vector<8x8xf32> to vector<8x8x1xf32>
    %94 = vector.broadcast %93 : vector<8x8x1xf32> to vector<8x8x8xf32>
    %95 = arith.subf %91, %94 : vector<8x8x8xf32>
    %96 = math.exp %95 : vector<8x8x8xf32>
    %cst_46 = arith.constant dense<0.000000e+00> : vector<8x8xf32>
    %97 = vector.multi_reduction <add>, %96, %cst_46 [2] : vector<8x8x8xf32> to vector<8x8xf32>
    %98 = vector.shape_cast %97 : vector<8x8xf32> to vector<8x8x1xf32>
    %99 = tpu.reciprocal %98 {approx = true} : vector<8x8x1xf32> -> vector<8x8x1xf32>
    %100 = vector.broadcast %99 : vector<8x8x1xf32> to vector<8x8x8xf32>
    %101 = arith.mulf %96, %100 : vector<8x8x8xf32>
    "tpu.trace_start"() <{level = 10 : i32, message = "bqk,bkd->bqd"}> : () -> ()
    %cst_47 = arith.constant dense<0.000000e+00> : vector<8x8x8xf32>
    %102 = tpu.matmul %101, %86, %cst_47 {dimension_numbers = #tpu.dot_dimension_numbers<[2], [1], [1], [2], [0, 0, 0, 1, 1, 2], [0], [0]>} : vector<8x8x8xf32>, vector<8x8x8xf32>, vector<8x8x8xf32> -> vector<8x8x8xf32>
    "tpu.trace_stop"() : () -> ()
    %103 = vector.extract_strided_slice %102 {offsets = [0, 0, 0], sizes = [2, 8, 8], strides = [1, 1, 1]} : vector<8x8x8xf32> to vector<2x8x8xf32>
    %104 = vector.extract_strided_slice %102 {offsets = [2, 0, 0], sizes = [2, 8, 8], strides = [1, 1, 1]} : vector<8x8x8xf32> to vector<2x8x8xf32>
    %105 = vector.extract_strided_slice %102 {offsets = [4, 0, 0], sizes = [2, 8, 8], strides = [1, 1, 1]} : vector<8x8x8xf32> to vector<2x8x8xf32>
    %106 = vector.extract_strided_slice %102 {offsets = [6, 0, 0], sizes = [2, 8, 8], strides = [1, 1, 1]} : vector<8x8x8xf32> to vector<2x8x8xf32>
    %107 = tpu.concatenate %103, %104, %105, %106 in 2 : vector<2x8x8xf32>, vector<2x8x8xf32>, vector<2x8x8xf32>, vector<2x8x8xf32> -> vector<2x8x32xf32>
    %108 = vector.shape_cast %107 : vector<2x8x32xf32> to vector<16x32xf32>
    %c0_48 = arith.constant 0 : index
    %c0_49 = arith.constant 0 : index
    %c0_50 = arith.constant 0 : index
    %109 = vector.load %arg13[%c0_48, %c0_49, %c0_50] : memref<2x32x32xf32, #tpu.memory_space<vmem>>, vector<1x32x32xf32>
    %110 = vector.shape_cast %109 : vector<1x32x32xf32> to vector<32x32xf32>
    %cst_51 = arith.constant dense<0.000000e+00> : vector<16x32xf32>
    %111 = tpu.matmul %108, %110, %cst_51 {dimension_numbers = #tpu.dot_dimension_numbers<[1], [0], [0], [1], [0, 0, 1, 1], [], []>} : vector<16x32xf32>, vector<32x32xf32>, vector<16x32xf32> -> vector<16x32xf32>
    %c0_52 = arith.constant 0 : index
    %c0_53 = arith.constant 0 : index
    %c0_54 = arith.constant 0 : index
    %112 = vector.load %arg14[%c0_52, %c0_53, %c0_54] : memref<2x1x32xf32, #tpu.memory_space<vmem>>, vector<1x1x32xf32>
    %113 = vector.shape_cast %112 : vector<1x1x32xf32> to vector<1x32xf32>
    %114 = vector.broadcast %113 : vector<1x32xf32> to vector<16x32xf32>
    %115 = arith.addf %111, %114 : vector<16x32xf32>
    %116 = arith.addf %40, %115 : vector<16x32xf32>
    %c0_55 = arith.constant 0 : index
    %c0_56 = arith.constant 0 : index
    %c0_57 = arith.constant 0 : index
    %117 = vector.load %arg15[%c0_55, %c0_56, %c0_57] : memref<2x1x32xf32, #tpu.memory_space<vmem>>, vector<1x1x32xf32>
    %118 = vector.shape_cast %117 : vector<1x1x32xf32> to vector<1x32xf32>
    %c0_58 = arith.constant 0 : index
    %c0_59 = arith.constant 0 : index
    %c0_60 = arith.constant 0 : index
    %119 = vector.load %arg16[%c0_58, %c0_59, %c0_60] : memref<2x1x32xf32, #tpu.memory_space<vmem>>, vector<1x1x32xf32>
    %120 = vector.shape_cast %119 : vector<1x1x32xf32> to vector<1x32xf32>
    %cst_61 = arith.constant dense<0.000000e+00> : vector<16xf32>
    %121 = vector.multi_reduction <add>, %116, %cst_61 [1] : vector<16x32xf32> to vector<16xf32>
    %122 = vector.shape_cast %121 : vector<16xf32> to vector<16x1xf32>
    %cst_62 = arith.constant 3.200000e+01 : f32
    %123 = vector.broadcast %cst_62 : f32 to vector<16x1xf32>
    %124 = arith.divf %122, %123 : vector<16x1xf32>
    %125 = vector.broadcast %124 : vector<16x1xf32> to vector<16x32xf32>
    %126 = arith.subf %116, %125 : vector<16x32xf32>
    %127 = arith.mulf %126, %126 : vector<16x32xf32>
    %cst_63 = arith.constant dense<0.000000e+00> : vector<16xf32>
    %128 = vector.multi_reduction <add>, %127, %cst_63 [1] : vector<16x32xf32> to vector<16xf32>
    %129 = vector.shape_cast %128 : vector<16xf32> to vector<16x1xf32>
    %cst_64 = arith.constant 3.200000e+01 : f32
    %130 = vector.broadcast %cst_64 : f32 to vector<16x1xf32>
    %131 = arith.divf %129, %130 : vector<16x1xf32>
    %132 = vector.broadcast %124 : vector<16x1xf32> to vector<16x32xf32>
    %133 = arith.subf %116, %132 : vector<16x32xf32>
    %cst_65 = arith.constant 9.99999996E-13 : f32
    %134 = vector.broadcast %cst_65 : f32 to vector<16x1xf32>
    %135 = arith.addf %131, %134 : vector<16x1xf32>
    %136 = math.rsqrt %135 : vector<16x1xf32>
    %137 = vector.broadcast %136 : vector<16x1xf32> to vector<16x32xf32>
    %138 = arith.mulf %133, %137 : vector<16x32xf32>
    %139 = vector.broadcast %118 : vector<1x32xf32> to vector<16x32xf32>
    %140 = arith.mulf %138, %139 : vector<16x32xf32>
    %141 = vector.broadcast %120 : vector<1x32xf32> to vector<16x32xf32>
    %142 = arith.addf %140, %141 : vector<16x32xf32>
    %c0_66 = arith.constant 0 : index
    %c0_67 = arith.constant 0 : index
    %c0_68 = arith.constant 0 : index
    %143 = vector.load %arg17[%c0_66, %c0_67, %c0_68] : memref<2x32x64xf32, #tpu.memory_space<vmem>>, vector<1x32x64xf32>
    %144 = vector.shape_cast %143 : vector<1x32x64xf32> to vector<32x64xf32>
    %cst_69 = arith.constant dense<0.000000e+00> : vector<16x64xf32>
    %145 = tpu.matmul %142, %144, %cst_69 {dimension_numbers = #tpu.dot_dimension_numbers<[1], [0], [0], [1], [0, 0, 1, 1], [], []>} : vector<16x32xf32>, vector<32x64xf32>, vector<16x64xf32> -> vector<16x64xf32>
    %c0_70 = arith.constant 0 : index
    %c0_71 = arith.constant 0 : index
    %c0_72 = arith.constant 0 : index
    %146 = vector.load %arg18[%c0_70, %c0_71, %c0_72] : memref<2x1x64xf32, #tpu.memory_space<vmem>>, vector<1x1x64xf32>
    %147 = vector.shape_cast %146 : vector<1x1x64xf32> to vector<1x64xf32>
    %148 = vector.broadcast %147 : vector<1x64xf32> to vector<16x64xf32>
    %149 = arith.addf %145, %148 : vector<16x64xf32>
    %150 = arith.mulf %149, %149 : vector<16x64xf32>
    %151 = arith.mulf %149, %150 : vector<16x64xf32>
    %cst_73 = arith.constant 4.471500e-02 : f32
    %152 = vector.broadcast %cst_73 : f32 to vector<16x64xf32>
    %153 = arith.mulf %152, %151 : vector<16x64xf32>
    %154 = arith.addf %149, %153 : vector<16x64xf32>
    %cst_74 = arith.constant 0.797884583 : f32
    %155 = vector.broadcast %cst_74 : f32 to vector<16x64xf32>
    %156 = arith.mulf %155, %154 : vector<16x64xf32>
    %157 = math.tanh %156 : vector<16x64xf32>
    %cst_75 = arith.constant 1.000000e+00 : f32
    %158 = vector.broadcast %cst_75 : f32 to vector<16x64xf32>
    %159 = arith.addf %158, %157 : vector<16x64xf32>
    %cst_76 = arith.constant 5.000000e-01 : f32
    %160 = vector.broadcast %cst_76 : f32 to vector<16x64xf32>
    %161 = arith.mulf %160, %159 : vector<16x64xf32>
    %162 = arith.mulf %149, %161 : vector<16x64xf32>
    %c0_77 = arith.constant 0 : index
    %c0_78 = arith.constant 0 : index
    %c0_79 = arith.constant 0 : index
    %163 = vector.load %arg19[%c0_77, %c0_78, %c0_79] : memref<2x64x32xf32, #tpu.memory_space<vmem>>, vector<1x64x32xf32>
    %164 = vector.shape_cast %163 : vector<1x64x32xf32> to vector<64x32xf32>
    %cst_80 = arith.constant dense<0.000000e+00> : vector<16x32xf32>
    %165 = tpu.matmul %162, %164, %cst_80 {dimension_numbers = #tpu.dot_dimension_numbers<[1], [0], [0], [1], [0, 0, 1, 1], [], []>} : vector<16x64xf32>, vector<64x32xf32>, vector<16x32xf32> -> vector<16x32xf32>
    %c0_81 = arith.constant 0 : index
    %c0_82 = arith.constant 0 : index
    %c0_83 = arith.constant 0 : index
    %166 = vector.load %arg20[%c0_81, %c0_82, %c0_83] : memref<2x1x32xf32, #tpu.memory_space<vmem>>, vector<1x1x32xf32>
    %167 = vector.shape_cast %166 : vector<1x1x32xf32> to vector<1x32xf32>
    %168 = vector.broadcast %167 : vector<1x32xf32> to vector<16x32xf32>
    %169 = arith.addf %165, %168 : vector<16x32xf32>
    %170 = arith.addf %142, %169 : vector<16x32xf32>
    %c0_84 = arith.constant 0 : index
    %c0_85 = arith.constant 0 : index
    %c0_86 = arith.constant 0 : index
    %171 = vector.load %arg21[%c0_84, %c0_85, %c0_86] : memref<2x1x32xf32, #tpu.memory_space<vmem>>, vector<1x1x32xf32>
    %172 = vector.shape_cast %171 : vector<1x1x32xf32> to vector<1x32xf32>
    %c0_87 = arith.constant 0 : index
    %c0_88 = arith.constant 0 : index
    %c0_89 = arith.constant 0 : index
    %173 = vector.load %arg22[%c0_87, %c0_88, %c0_89] : memref<2x1x32xf32, #tpu.memory_space<vmem>>, vector<1x1x32xf32>
    %174 = vector.shape_cast %173 : vector<1x1x32xf32> to vector<1x32xf32>
    %cst_90 = arith.constant dense<0.000000e+00> : vector<16xf32>
    %175 = vector.multi_reduction <add>, %170, %cst_90 [1] : vector<16x32xf32> to vector<16xf32>
    %176 = vector.shape_cast %175 : vector<16xf32> to vector<16x1xf32>
    %cst_91 = arith.constant 3.200000e+01 : f32
    %177 = vector.broadcast %cst_91 : f32 to vector<16x1xf32>
    %178 = arith.divf %176, %177 : vector<16x1xf32>
    %179 = vector.broadcast %178 : vector<16x1xf32> to vector<16x32xf32>
    %180 = arith.subf %170, %179 : vector<16x32xf32>
    %181 = arith.mulf %180, %180 : vector<16x32xf32>
    %cst_92 = arith.constant dense<0.000000e+00> : vector<16xf32>
    %182 = vector.multi_reduction <add>, %181, %cst_92 [1] : vector<16x32xf32> to vector<16xf32>
    %183 = vector.shape_cast %182 : vector<16xf32> to vector<16x1xf32>
    %cst_93 = arith.constant 3.200000e+01 : f32
    %184 = vector.broadcast %cst_93 : f32 to vector<16x1xf32>
    %185 = arith.divf %183, %184 : vector<16x1xf32>
    %186 = vector.broadcast %178 : vector<16x1xf32> to vector<16x32xf32>
    %187 = arith.subf %170, %186 : vector<16x32xf32>
    %cst_94 = arith.constant 9.99999996E-13 : f32
    %188 = vector.broadcast %cst_94 : f32 to vector<16x1xf32>
    %189 = arith.addf %185, %188 : vector<16x1xf32>
    %190 = math.rsqrt %189 : vector<16x1xf32>
    %191 = vector.broadcast %190 : vector<16x1xf32> to vector<16x32xf32>
    %192 = arith.mulf %187, %191 : vector<16x32xf32>
    %193 = vector.broadcast %172 : vector<1x32xf32> to vector<16x32xf32>
    %194 = arith.mulf %192, %193 : vector<16x32xf32>
    %195 = vector.broadcast %174 : vector<1x32xf32> to vector<16x32xf32>
    %196 = arith.addf %194, %195 : vector<16x32xf32>
    %c1 = arith.constant 1 : index
    %c0_95 = arith.constant 0 : index
    %c0_96 = arith.constant 0 : index
    %197 = vector.load %arg7[%c1, %c0_95, %c0_96] : memref<2x32x32xf32, #tpu.memory_space<vmem>>, vector<1x32x32xf32>
    %198 = vector.shape_cast %197 : vector<1x32x32xf32> to vector<32x32xf32>
    %cst_97 = arith.constant dense<0.000000e+00> : vector<16x32xf32>
    %199 = tpu.matmul %196, %198, %cst_97 {dimension_numbers = #tpu.dot_dimension_numbers<[1], [0], [0], [1], [0, 0, 1, 1], [], []>} : vector<16x32xf32>, vector<32x32xf32>, vector<16x32xf32> -> vector<16x32xf32>
    %c1_98 = arith.constant 1 : index
    %c0_99 = arith.constant 0 : index
    %c0_100 = arith.constant 0 : index
    %200 = vector.load %arg8[%c1_98, %c0_99, %c0_100] : memref<2x1x32xf32, #tpu.memory_space<vmem>>, vector<1x1x32xf32>
    %201 = vector.shape_cast %200 : vector<1x1x32xf32> to vector<1x32xf32>
    %202 = vector.broadcast %201 : vector<1x32xf32> to vector<16x32xf32>
    %203 = arith.addf %199, %202 : vector<16x32xf32>
    %c1_101 = arith.constant 1 : index
    %c0_102 = arith.constant 0 : index
    %c0_103 = arith.constant 0 : index
    %204 = vector.load %arg9[%c1_101, %c0_102, %c0_103] : memref<2x32x32xf32, #tpu.memory_space<vmem>>, vector<1x32x32xf32>
    %205 = vector.shape_cast %204 : vector<1x32x32xf32> to vector<32x32xf32>
    %cst_104 = arith.constant dense<0.000000e+00> : vector<16x32xf32>
    %206 = tpu.matmul %196, %205, %cst_104 {dimension_numbers = #tpu.dot_dimension_numbers<[1], [0], [0], [1], [0, 0, 1, 1], [], []>} : vector<16x32xf32>, vector<32x32xf32>, vector<16x32xf32> -> vector<16x32xf32>
    %c1_105 = arith.constant 1 : index
    %c0_106 = arith.constant 0 : index
    %c0_107 = arith.constant 0 : index
    %207 = vector.load %arg10[%c1_105, %c0_106, %c0_107] : memref<2x1x32xf32, #tpu.memory_space<vmem>>, vector<1x1x32xf32>
    %208 = vector.shape_cast %207 : vector<1x1x32xf32> to vector<1x32xf32>
    %209 = vector.broadcast %208 : vector<1x32xf32> to vector<16x32xf32>
    %210 = arith.addf %206, %209 : vector<16x32xf32>
    %c1_108 = arith.constant 1 : index
    %c0_109 = arith.constant 0 : index
    %c0_110 = arith.constant 0 : index
    %211 = vector.load %arg11[%c1_108, %c0_109, %c0_110] : memref<2x32x32xf32, #tpu.memory_space<vmem>>, vector<1x32x32xf32>
    %212 = vector.shape_cast %211 : vector<1x32x32xf32> to vector<32x32xf32>
    %cst_111 = arith.constant dense<0.000000e+00> : vector<16x32xf32>
    %213 = tpu.matmul %196, %212, %cst_111 {dimension_numbers = #tpu.dot_dimension_numbers<[1], [0], [0], [1], [0, 0, 1, 1], [], []>} : vector<16x32xf32>, vector<32x32xf32>, vector<16x32xf32> -> vector<16x32xf32>
    %c1_112 = arith.constant 1 : index
    %c0_113 = arith.constant 0 : index
    %c0_114 = arith.constant 0 : index
    %214 = vector.load %arg12[%c1_112, %c0_113, %c0_114] : memref<2x1x32xf32, #tpu.memory_space<vmem>>, vector<1x1x32xf32>
    %215 = vector.shape_cast %214 : vector<1x1x32xf32> to vector<1x32xf32>
    %216 = vector.broadcast %215 : vector<1x32xf32> to vector<16x32xf32>
    %217 = arith.addf %213, %216 : vector<16x32xf32>
    %218 = vector.shape_cast %203 : vector<16x32xf32> to vector<2x8x32xf32>
    %219 = vector.shape_cast %210 : vector<16x32xf32> to vector<2x8x32xf32>
    %220 = vector.shape_cast %217 : vector<16x32xf32> to vector<2x8x32xf32>
    %221 = vector.extract_strided_slice %218 {offsets = [0, 0, 0], sizes = [2, 8, 8], strides = [1, 1, 1]} : vector<2x8x32xf32> to vector<2x8x8xf32>
    %222 = vector.extract_strided_slice %218 {offsets = [0, 0, 8], sizes = [2, 8, 8], strides = [1, 1, 1]} : vector<2x8x32xf32> to vector<2x8x8xf32>
    %223 = vector.extract_strided_slice %218 {offsets = [0, 0, 16], sizes = [2, 8, 8], strides = [1, 1, 1]} : vector<2x8x32xf32> to vector<2x8x8xf32>
    %224 = vector.extract_strided_slice %218 {offsets = [0, 0, 24], sizes = [2, 8, 8], strides = [1, 1, 1]} : vector<2x8x32xf32> to vector<2x8x8xf32>
    %225 = tpu.concatenate %221, %222, %223, %224 in 0 : vector<2x8x8xf32>, vector<2x8x8xf32>, vector<2x8x8xf32>, vector<2x8x8xf32> -> vector<8x8x8xf32>
    %226 = vector.extract_strided_slice %219 {offsets = [0, 0, 0], sizes = [2, 8, 8], strides = [1, 1, 1]} : vector<2x8x32xf32> to vector<2x8x8xf32>
    %227 = vector.extract_strided_slice %219 {offsets = [0, 0, 8], sizes = [2, 8, 8], strides = [1, 1, 1]} : vector<2x8x32xf32> to vector<2x8x8xf32>
    %228 = vector.extract_strided_slice %219 {offsets = [0, 0, 16], sizes = [2, 8, 8], strides = [1, 1, 1]} : vector<2x8x32xf32> to vector<2x8x8xf32>
    %229 = vector.extract_strided_slice %219 {offsets = [0, 0, 24], sizes = [2, 8, 8], strides = [1, 1, 1]} : vector<2x8x32xf32> to vector<2x8x8xf32>
    %230 = tpu.concatenate %226, %227, %228, %229 in 0 : vector<2x8x8xf32>, vector<2x8x8xf32>, vector<2x8x8xf32>, vector<2x8x8xf32> -> vector<8x8x8xf32>
    %231 = vector.extract_strided_slice %220 {offsets = [0, 0, 0], sizes = [2, 8, 8], strides = [1, 1, 1]} : vector<2x8x32xf32> to vector<2x8x8xf32>
    %232 = vector.extract_strided_slice %220 {offsets = [0, 0, 8], sizes = [2, 8, 8], strides = [1, 1, 1]} : vector<2x8x32xf32> to vector<2x8x8xf32>
    %233 = vector.extract_strided_slice %220 {offsets = [0, 0, 16], sizes = [2, 8, 8], strides = [1, 1, 1]} : vector<2x8x32xf32> to vector<2x8x8xf32>
    %234 = vector.extract_strided_slice %220 {offsets = [0, 0, 24], sizes = [2, 8, 8], strides = [1, 1, 1]} : vector<2x8x32xf32> to vector<2x8x8xf32>
    %235 = tpu.concatenate %231, %232, %233, %234 in 0 : vector<2x8x8xf32>, vector<2x8x8xf32>, vector<2x8x8xf32>, vector<2x8x8xf32> -> vector<8x8x8xf32>
    "tpu.trace_start"() <{level = 10 : i32, message = "bqd,bkd->bqk"}> : () -> ()
    %cst_115 = arith.constant dense<0.000000e+00> : vector<8x8x8xf32>
    %236 = tpu.matmul %225, %230, %cst_115 {dimension_numbers = #tpu.dot_dimension_numbers<[2], [2], [1], [1], [0, 0, 0, 1, 1, 1], [0], [0]>} : vector<8x8x8xf32>, vector<8x8x8xf32>, vector<8x8x8xf32> -> vector<8x8x8xf32>
    "tpu.trace_stop"() : () -> ()
    %cst_116 = arith.constant 0.353553385 : f32
    %237 = vector.broadcast %cst_116 : f32 to vector<8x8x8xf32>
    %238 = arith.mulf %236, %237 : vector<8x8x8xf32>
    %239 = vector.broadcast %47 : vector<8x1x8xf32> to vector<8x8x8xf32>
    %240 = arith.addf %238, %239 : vector<8x8x8xf32>
    %cst_117 = arith.constant dense<0xFF800000> : vector<8x8xf32>
    %241 = vector.multi_reduction <maximumf>, %240, %cst_117 [2] : vector<8x8x8xf32> to vector<8x8xf32>
    %242 = vector.shape_cast %241 : vector<8x8xf32> to vector<8x8x1xf32>
    %243 = vector.broadcast %242 : vector<8x8x1xf32> to vector<8x8x8xf32>
    %244 = arith.subf %240, %243 : vector<8x8x8xf32>
    %245 = math.exp %244 : vector<8x8x8xf32>
    %cst_118 = arith.constant dense<0.000000e+00> : vector<8x8xf32>
    %246 = vector.multi_reduction <add>, %245, %cst_118 [2] : vector<8x8x8xf32> to vector<8x8xf32>
    %247 = vector.shape_cast %246 : vector<8x8xf32> to vector<8x8x1xf32>
    %248 = tpu.reciprocal %247 {approx = true} : vector<8x8x1xf32> -> vector<8x8x1xf32>
    %249 = vector.broadcast %248 : vector<8x8x1xf32> to vector<8x8x8xf32>
    %250 = arith.mulf %245, %249 : vector<8x8x8xf32>
    "tpu.trace_start"() <{level = 10 : i32, message = "bqk,bkd->bqd"}> : () -> ()
    %cst_119 = arith.constant dense<0.000000e+00> : vector<8x8x8xf32>
    %251 = tpu.matmul %250, %235, %cst_119 {dimension_numbers = #tpu.dot_dimension_numbers<[2], [1], [1], [2], [0, 0, 0, 1, 1, 2], [0], [0]>} : vector<8x8x8xf32>, vector<8x8x8xf32>, vector<8x8x8xf32> -> vector<8x8x8xf32>
    "tpu.trace_stop"() : () -> ()
    %252 = vector.extract_strided_slice %251 {offsets = [0, 0, 0], sizes = [2, 8, 8], strides = [1, 1, 1]} : vector<8x8x8xf32> to vector<2x8x8xf32>
    %253 = vector.extract_strided_slice %251 {offsets = [2, 0, 0], sizes = [2, 8, 8], strides = [1, 1, 1]} : vector<8x8x8xf32> to vector<2x8x8xf32>
    %254 = vector.extract_strided_slice %251 {offsets = [4, 0, 0], sizes = [2, 8, 8], strides = [1, 1, 1]} : vector<8x8x8xf32> to vector<2x8x8xf32>
    %255 = vector.extract_strided_slice %251 {offsets = [6, 0, 0], sizes = [2, 8, 8], strides = [1, 1, 1]} : vector<8x8x8xf32> to vector<2x8x8xf32>
    %256 = tpu.concatenate %252, %253, %254, %255 in 2 : vector<2x8x8xf32>, vector<2x8x8xf32>, vector<2x8x8xf32>, vector<2x8x8xf32> -> vector<2x8x32xf32>
    %257 = vector.shape_cast %256 : vector<2x8x32xf32> to vector<16x32xf32>
    %c1_120 = arith.constant 1 : index
    %c0_121 = arith.constant 0 : index
    %c0_122 = arith.constant 0 : index
    %258 = vector.load %arg13[%c1_120, %c0_121, %c0_122] : memref<2x32x32xf32, #tpu.memory_space<vmem>>, vector<1x32x32xf32>
    %259 = vector.shape_cast %258 : vector<1x32x32xf32> to vector<32x32xf32>
    %cst_123 = arith.constant dense<0.000000e+00> : vector<16x32xf32>
    %260 = tpu.matmul %257, %259, %cst_123 {dimension_numbers = #tpu.dot_dimension_numbers<[1], [0], [0], [1], [0, 0, 1, 1], [], []>} : vector<16x32xf32>, vector<32x32xf32>, vector<16x32xf32> -> vector<16x32xf32>
    %c1_124 = arith.constant 1 : index
    %c0_125 = arith.constant 0 : index
    %c0_126 = arith.constant 0 : index
    %261 = vector.load %arg14[%c1_124, %c0_125, %c0_126] : memref<2x1x32xf32, #tpu.memory_space<vmem>>, vector<1x1x32xf32>
    %262 = vector.shape_cast %261 : vector<1x1x32xf32> to vector<1x32xf32>
    %263 = vector.broadcast %262 : vector<1x32xf32> to vector<16x32xf32>
    %264 = arith.addf %260, %263 : vector<16x32xf32>
    %265 = arith.addf %196, %264 : vector<16x32xf32>
    %c1_127 = arith.constant 1 : index
    %c0_128 = arith.constant 0 : index
    %c0_129 = arith.constant 0 : index
    %266 = vector.load %arg15[%c1_127, %c0_128, %c0_129] : memref<2x1x32xf32, #tpu.memory_space<vmem>>, vector<1x1x32xf32>
    %267 = vector.shape_cast %266 : vector<1x1x32xf32> to vector<1x32xf32>
    %c1_130 = arith.constant 1 : index
    %c0_131 = arith.constant 0 : index
    %c0_132 = arith.constant 0 : index
    %268 = vector.load %arg16[%c1_130, %c0_131, %c0_132] : memref<2x1x32xf32, #tpu.memory_space<vmem>>, vector<1x1x32xf32>
    %269 = vector.shape_cast %268 : vector<1x1x32xf32> to vector<1x32xf32>
    %cst_133 = arith.constant dense<0.000000e+00> : vector<16xf32>
    %270 = vector.multi_reduction <add>, %265, %cst_133 [1] : vector<16x32xf32> to vector<16xf32>
    %271 = vector.shape_cast %270 : vector<16xf32> to vector<16x1xf32>
    %cst_134 = arith.constant 3.200000e+01 : f32
    %272 = vector.broadcast %cst_134 : f32 to vector<16x1xf32>
    %273 = arith.divf %271, %272 : vector<16x1xf32>
    %274 = vector.broadcast %273 : vector<16x1xf32> to vector<16x32xf32>
    %275 = arith.subf %265, %274 : vector<16x32xf32>
    %276 = arith.mulf %275, %275 : vector<16x32xf32>
    %cst_135 = arith.constant dense<0.000000e+00> : vector<16xf32>
    %277 = vector.multi_reduction <add>, %276, %cst_135 [1] : vector<16x32xf32> to vector<16xf32>
    %278 = vector.shape_cast %277 : vector<16xf32> to vector<16x1xf32>
    %cst_136 = arith.constant 3.200000e+01 : f32
    %279 = vector.broadcast %cst_136 : f32 to vector<16x1xf32>
    %280 = arith.divf %278, %279 : vector<16x1xf32>
    %281 = vector.broadcast %273 : vector<16x1xf32> to vector<16x32xf32>
    %282 = arith.subf %265, %281 : vector<16x32xf32>
    %cst_137 = arith.constant 9.99999996E-13 : f32
    %283 = vector.broadcast %cst_137 : f32 to vector<16x1xf32>
    %284 = arith.addf %280, %283 : vector<16x1xf32>
    %285 = math.rsqrt %284 : vector<16x1xf32>
    %286 = vector.broadcast %285 : vector<16x1xf32> to vector<16x32xf32>
    %287 = arith.mulf %282, %286 : vector<16x32xf32>
    %288 = vector.broadcast %267 : vector<1x32xf32> to vector<16x32xf32>
    %289 = arith.mulf %287, %288 : vector<16x32xf32>
    %290 = vector.broadcast %269 : vector<1x32xf32> to vector<16x32xf32>
    %291 = arith.addf %289, %290 : vector<16x32xf32>
    %c1_138 = arith.constant 1 : index
    %c0_139 = arith.constant 0 : index
    %c0_140 = arith.constant 0 : index
    %292 = vector.load %arg17[%c1_138, %c0_139, %c0_140] : memref<2x32x64xf32, #tpu.memory_space<vmem>>, vector<1x32x64xf32>
    %293 = vector.shape_cast %292 : vector<1x32x64xf32> to vector<32x64xf32>
    %cst_141 = arith.constant dense<0.000000e+00> : vector<16x64xf32>
    %294 = tpu.matmul %291, %293, %cst_141 {dimension_numbers = #tpu.dot_dimension_numbers<[1], [0], [0], [1], [0, 0, 1, 1], [], []>} : vector<16x32xf32>, vector<32x64xf32>, vector<16x64xf32> -> vector<16x64xf32>
    %c1_142 = arith.constant 1 : index
    %c0_143 = arith.constant 0 : index
    %c0_144 = arith.constant 0 : index
    %295 = vector.load %arg18[%c1_142, %c0_143, %c0_144] : memref<2x1x64xf32, #tpu.memory_space<vmem>>, vector<1x1x64xf32>
    %296 = vector.shape_cast %295 : vector<1x1x64xf32> to vector<1x64xf32>
    %297 = vector.broadcast %296 : vector<1x64xf32> to vector<16x64xf32>
    %298 = arith.addf %294, %297 : vector<16x64xf32>
    %299 = arith.mulf %298, %298 : vector<16x64xf32>
    %300 = arith.mulf %298, %299 : vector<16x64xf32>
    %cst_145 = arith.constant 4.471500e-02 : f32
    %301 = vector.broadcast %cst_145 : f32 to vector<16x64xf32>
    %302 = arith.mulf %301, %300 : vector<16x64xf32>
    %303 = arith.addf %298, %302 : vector<16x64xf32>
    %cst_146 = arith.constant 0.797884583 : f32
    %304 = vector.broadcast %cst_146 : f32 to vector<16x64xf32>
    %305 = arith.mulf %304, %303 : vector<16x64xf32>
    %306 = math.tanh %305 : vector<16x64xf32>
    %cst_147 = arith.constant 1.000000e+00 : f32
    %307 = vector.broadcast %cst_147 : f32 to vector<16x64xf32>
    %308 = arith.addf %307, %306 : vector<16x64xf32>
    %cst_148 = arith.constant 5.000000e-01 : f32
    %309 = vector.broadcast %cst_148 : f32 to vector<16x64xf32>
    %310 = arith.mulf %309, %308 : vector<16x64xf32>
    %311 = arith.mulf %298, %310 : vector<16x64xf32>
    %c1_149 = arith.constant 1 : index
    %c0_150 = arith.constant 0 : index
    %c0_151 = arith.constant 0 : index
    %312 = vector.load %arg19[%c1_149, %c0_150, %c0_151] : memref<2x64x32xf32, #tpu.memory_space<vmem>>, vector<1x64x32xf32>
    %313 = vector.shape_cast %312 : vector<1x64x32xf32> to vector<64x32xf32>
    %cst_152 = arith.constant dense<0.000000e+00> : vector<16x32xf32>
    %314 = tpu.matmul %311, %313, %cst_152 {dimension_numbers = #tpu.dot_dimension_numbers<[1], [0], [0], [1], [0, 0, 1, 1], [], []>} : vector<16x64xf32>, vector<64x32xf32>, vector<16x32xf32> -> vector<16x32xf32>
    %c1_153 = arith.constant 1 : index
    %c0_154 = arith.constant 0 : index
    %c0_155 = arith.constant 0 : index
    %315 = vector.load %arg20[%c1_153, %c0_154, %c0_155] : memref<2x1x32xf32, #tpu.memory_space<vmem>>, vector<1x1x32xf32>
    %316 = vector.shape_cast %315 : vector<1x1x32xf32> to vector<1x32xf32>
    %317 = vector.broadcast %316 : vector<1x32xf32> to vector<16x32xf32>
    %318 = arith.addf %314, %317 : vector<16x32xf32>
    %319 = arith.addf %291, %318 : vector<16x32xf32>
    %c1_156 = arith.constant 1 : index
    %c0_157 = arith.constant 0 : index
    %c0_158 = arith.constant 0 : index
    %320 = vector.load %arg21[%c1_156, %c0_157, %c0_158] : memref<2x1x32xf32, #tpu.memory_space<vmem>>, vector<1x1x32xf32>
    %321 = vector.shape_cast %320 : vector<1x1x32xf32> to vector<1x32xf32>
    %c1_159 = arith.constant 1 : index
    %c0_160 = arith.constant 0 : index
    %c0_161 = arith.constant 0 : index
    %322 = vector.load %arg22[%c1_159, %c0_160, %c0_161] : memref<2x1x32xf32, #tpu.memory_space<vmem>>, vector<1x1x32xf32>
    %323 = vector.shape_cast %322 : vector<1x1x32xf32> to vector<1x32xf32>
    %cst_162 = arith.constant dense<0.000000e+00> : vector<16xf32>
    %324 = vector.multi_reduction <add>, %319, %cst_162 [1] : vector<16x32xf32> to vector<16xf32>
    %325 = vector.shape_cast %324 : vector<16xf32> to vector<16x1xf32>
    %cst_163 = arith.constant 3.200000e+01 : f32
    %326 = vector.broadcast %cst_163 : f32 to vector<16x1xf32>
    %327 = arith.divf %325, %326 : vector<16x1xf32>
    %328 = vector.broadcast %327 : vector<16x1xf32> to vector<16x32xf32>
    %329 = arith.subf %319, %328 : vector<16x32xf32>
    %330 = arith.mulf %329, %329 : vector<16x32xf32>
    %cst_164 = arith.constant dense<0.000000e+00> : vector<16xf32>
    %331 = vector.multi_reduction <add>, %330, %cst_164 [1] : vector<16x32xf32> to vector<16xf32>
    %332 = vector.shape_cast %331 : vector<16xf32> to vector<16x1xf32>
    %cst_165 = arith.constant 3.200000e+01 : f32
    %333 = vector.broadcast %cst_165 : f32 to vector<16x1xf32>
    %334 = arith.divf %332, %333 : vector<16x1xf32>
    %335 = vector.broadcast %327 : vector<16x1xf32> to vector<16x32xf32>
    %336 = arith.subf %319, %335 : vector<16x32xf32>
    %cst_166 = arith.constant 9.99999996E-13 : f32
    %337 = vector.broadcast %cst_166 : f32 to vector<16x1xf32>
    %338 = arith.addf %334, %337 : vector<16x1xf32>
    %339 = math.rsqrt %338 : vector<16x1xf32>
    %340 = vector.broadcast %339 : vector<16x1xf32> to vector<16x32xf32>
    %341 = arith.mulf %336, %340 : vector<16x32xf32>
    %342 = vector.broadcast %321 : vector<1x32xf32> to vector<16x32xf32>
    %343 = arith.mulf %341, %342 : vector<16x32xf32>
    %344 = vector.broadcast %323 : vector<1x32xf32> to vector<16x32xf32>
    %345 = arith.addf %343, %344 : vector<16x32xf32>
    %346 = vector.shape_cast %345 : vector<16x32xf32> to vector<2x8x32xf32>
    %347 = vector.extract_strided_slice %346 {offsets = [0, 0, 0], sizes = [2, 1, 32], strides = [1, 1, 1]} : vector<2x8x32xf32> to vector<2x1x32xf32>
    %348 = vector.shape_cast %347 : vector<2x1x32xf32> to vector<2x32xf32>
    %c0_167 = arith.constant 0 : index
    %c0_168 = arith.constant 0 : index
    %349 = vector.load %arg23[%c0_167, %c0_168] : memref<32x32xf32, #tpu.memory_space<vmem>>, vector<32x32xf32>
    %cst_169 = arith.constant dense<0.000000e+00> : vector<2x32xf32>
    %350 = tpu.matmul %348, %349, %cst_169 {dimension_numbers = #tpu.dot_dimension_numbers<[1], [0], [0], [1], [0, 0, 1, 1], [], []>} : vector<2x32xf32>, vector<32x32xf32>, vector<2x32xf32> -> vector<2x32xf32>
    %c0_170 = arith.constant 0 : index
    %c0_171 = arith.constant 0 : index
    %351 = vector.load %arg24[%c0_170, %c0_171] : memref<1x32xf32, #tpu.memory_space<vmem>>, vector<1x32xf32>
    %352 = vector.broadcast %351 : vector<1x32xf32> to vector<2x32xf32>
    %353 = arith.addf %350, %352 : vector<2x32xf32>
    %354 = math.tanh %353 : vector<2x32xf32>
    %c0_172 = arith.constant 0 : index
    %c0_173 = arith.constant 0 : index
    %355 = vector.load %arg25[%c0_172, %c0_173] : memref<32x2xf32, #tpu.memory_space<vmem>>, vector<32x2xf32>
    %cst_174 = arith.constant dense<0.000000e+00> : vector<2x2xf32>
    %356 = tpu.matmul %354, %355, %cst_174 {dimension_numbers = #tpu.dot_dimension_numbers<[1], [0], [0], [1], [0, 0, 1, 1], [], []>} : vector<2x32xf32>, vector<32x2xf32>, vector<2x2xf32> -> vector<2x2xf32>
    %c0_175 = arith.constant 0 : index
    %c0_176 = arith.constant 0 : index
    %357 = vector.load %arg26[%c0_175, %c0_176] : memref<1x2xf32, #tpu.memory_space<vmem>>, vector<1x2xf32>
    %358 = vector.broadcast %357 : vector<1x2xf32> to vector<2x2xf32>
    %359 = arith.addf %356, %358 : vector<2x2xf32>
    %c0_177 = arith.constant 0 : index
    %c0_178 = arith.constant 0 : index
    %360 = vector.load %arg27[%c0_177, %c0_178] : memref<2x2xf32, #tpu.memory_space<vmem>>, vector<2x2xf32>
    tpu.vector_store %arg27[%c0_177, %c0_178], %359 {strides = array<i32>} : memref<2x2xf32, #tpu.memory_space<vmem>>, vector<2x2xf32>,
    return
  }
}

</mosaic_0001>

<llo_original>
// kernel: tpu_custom_call.1
$region0: #{tpu_custom_call.1}
  #allocation0 [shape = 'u32[]', space=smem, size = 0x4, offset = 0x4, fixed_abs, tag = 'smem constant byte address 0x4 - core index']
  #allocation1 [shape = 'u32[72,128]{1,0:T(1,128)}', space=vmem, size = 0x9000, scoped, tag = 'internal scratch']
  %s0 = inlined_call_operand.vmem [shape: s32[16,1], index: 0, kind: input, shape index: {}]
  %s1 = inlined_call_operand.vmem [shape: f32[2,8], index: 1, kind: input, shape index: {}]
  %s2 = inlined_call_operand.vmem [shape: f32[64,32], index: 2, kind: input, shape index: {}]
  %s3 = inlined_call_operand.vmem [shape: f32[16,32], index: 3, kind: input, shape index: {}]
  %s4 = inlined_call_operand.vmem [shape: f32[2,32], index: 4, kind: input, shape index: {}]
  %s5 = inlined_call_operand.hbm [shape: f32[1,32], index: 5, kind: input, shape index: {}]
  %s6 = inlined_call_operand.hbm [shape: f32[1,32], index: 6, kind: input, shape index: {}]
  %s7 = inlined_call_operand.vmem [shape: f32[2,32,32], index: 7, kind: input, shape index: {}]
  %s8 = inlined_call_operand.vmem [shape: f32[2,1,32], index: 8, kind: input, shape index: {}]
  %s9 = inlined_call_operand.vmem [shape: f32[2,32,32], index: 9, kind: input, shape index: {}]
  %s10 = inlined_call_operand.vmem [shape: f32[2,1,32], index: 10, kind: input, shape index: {}]
  %s11 = inlined_call_operand.vmem [shape: f32[2,32,32], index: 11, kind: input, shape index: {}]
  %s12 = inlined_call_operand.vmem [shape: f32[2,1,32], index: 12, kind: input, shape index: {}]
  %s13 = inlined_call_operand.hbm [shape: f32[2,32,32], index: 13, kind: input, shape index: {}]
  %s14 = inlined_call_operand.vmem [shape: f32[2,1,32], index: 14, kind: input, shape index: {}]
  %s15 = inlined_call_operand.hbm [shape: f32[2,1,32], index: 15, kind: input, shape index: {}]
  %s16 = inlined_call_operand.vmem [shape: f32[2,1,32], index: 16, kind: input, shape index: {}]
  %s17 = inlined_call_operand.hbm [shape: f32[2,32,64], index: 17, kind: input, shape index: {}]
  %s18 = inlined_call_operand.vmem [shape: f32[2,1,64], index: 18, kind: input, shape index: {}]
  %s19 = inlined_call_operand.vmem [shape: f32[2,64,32], index: 19, kind: input, shape index: {}]
  %s20 = inlined_call_operand.vmem [shape: f32[2,1,32], index: 20, kind: input, shape index: {}]
  %s21 = inlined_call_operand.vmem [shape: f32[2,1,32], index: 21, kind: input, shape index: {}]
  %s22 = inlined_call_operand.hbm [shape: f32[2,1,32], index: 22, kind: input, shape index: {}]
  %s23 = inlined_call_operand.vmem [shape: f32[32,32], index: 23, kind: input, shape index: {}]
  %s24 = inlined_call_operand.vmem [shape: f32[1,32], index: 24, kind: input, shape index: {}]
  %s25 = inlined_call_operand.vmem [shape: f32[32,2], index: 25, kind: input, shape index: {}]
  %s26 = inlined_call_operand.vmem [shape: f32[1,2], index: 26, kind: input, shape index: {}]
  %s27 = inlined_call_operand.hbm [shape: f32[2,2], index: 27, kind: output, shape index: {}]
  %s28 = sld [smem:[#allocation0]]
  $region142: #{tpu_custom_call.1} parent=0
    _
  %s30 = ssub.s32 1, %s28
  %s31 = scalar_select 0, %s30, %s28
  $region1: #{tpu_custom_call.1} parent=0
    #allocation2 [shape = 'u8[512]{0}', space=vmem, size = 0x400, scoped, tag = 'input window, operand 5, single buffered']
    #allocation3 [shape = 's32[1]{0}', space=sflag, size = 0x4, scoped, tag = 'scoped memory for tpu_custom_call.1']
    #allocation4 [shape = 's32[1]{0}', space=sflag, size = 0x4, scoped, tag = 'scoped memory for tpu_custom_call.1']
    #allocation5 [shape = 'u8[512]{0}', space=vmem, size = 0x400, scoped, tag = 'input window, operand 6, single buffered']
    #allocation6 [shape = 's32[1]{0}', space=sflag, size = 0x4, scoped, tag = 'scoped memory for tpu_custom_call.1']
    #allocation7 [shape = 'u8[32768]{0}', space=vmem, size = 0x8000, scoped, tag = 'input window, operand 13, single buffered']
    #allocation8 [shape = 'u8[1024]{0}', space=vmem, size = 0x400, scoped, tag = 'input window, operand 15, single buffered']
    #allocation9 [shape = 's32[1]{0}', space=sflag, size = 0x4, scoped, tag = 'scoped memory for tpu_custom_call.1']
    #allocation10 [shape = 'u8[32768]{0}', space=vmem, size = 0x8000, scoped, tag = 'input window, operand 17, single buffered']
    #allocation11 [shape = 'u8[1024]{0}', space=vmem, size = 0x400, scoped, tag = 'input window, operand 22, single buffered']
    #allocation12 [shape = 's32[1]{0}', space=sflag, size = 0x4, scoped, tag = 'scoped memory for tpu_custom_call.1']
    #allocation13 [shape = 'u8[1024]{0}', space=vmem, size = 0x400, scoped, tag = 'output window, operand 0, single buffered']
    %32 = vsyncpa [#allocation3], 0
    %33 = vsyncpa [#allocation6], 0
    %34 = vsyncpa [#allocation9], 0
    %35 = vsyncpa [#allocation12], 0
    %36 = vsyncpa [#allocation4], 0
    // Predicated region
    $region2: #{tpu_custom_call.1} parent=1 // pred_check
      _
    $region3: #{tpu_custom_call.1} parent=1 // pred_check_branch
      %38 = sbr.rel (0) target = $region5
    $region4: #{tpu_custom_call.1} parent=1 // pred_region
      _
    $region5: #{tpu_custom_call.1} parent=1 // pred_fallthru
      _
    // Predicated region
    $region6: #{tpu_custom_call.1} parent=1 // pred_check
      _
    $region7: #{tpu_custom_call.1} parent=1 // pred_check_branch
      %40 = sbr.rel (0) target = $region9
    $region8: #{tpu_custom_call.1} parent=1 // pred_region
      _
    $region9: #{tpu_custom_call.1} parent=1 // pred_fallthru
      _
    // Predicated region
    $region10: #{tpu_custom_call.1} parent=1 // pred_check
      _
    $region11: #{tpu_custom_call.1} parent=1 // pred_check_branch
      %42 = sbr.rel (0) target = $region13
    $region12: #{tpu_custom_call.1} parent=1 // pred_region
      _
    $region13: #{tpu_custom_call.1} parent=1 // pred_fallthru
      _
    // Predicated region
    $region14: #{tpu_custom_call.1} parent=1 // pred_check
      _
    $region15: #{tpu_custom_call.1} parent=1 // pred_check_branch
      %44 = sbr.rel (0) target = $region17
    $region16: #{tpu_custom_call.1} parent=1 // pred_region
      _
    $region17: #{tpu_custom_call.1} parent=1 // pred_fallthru
      _
    // Predicated region
    $region18: #{tpu_custom_call.1} parent=1 // pred_check
      _
    $region19: #{tpu_custom_call.1} parent=1 // pred_check_branch
      %46 = sbr.rel (0) target = $region21
    $region20: #{tpu_custom_call.1} parent=1 // pred_region
      _
    $region21: #{tpu_custom_call.1} parent=1 // pred_fallthru
      _
    // Predicated region
    $region22: #{tpu_custom_call.1} parent=1 // pred_check
      _
    $region23: #{tpu_custom_call.1} parent=1 // pred_check_branch
      %48 = sbr.rel (0) target = $region25
    $region24: #{tpu_custom_call.1} parent=1 // pred_region
      %50 = vsyncadd [#allocation3], 0
      %s52 = sshll.u32 %s5, 4
      %s53 = int_to_ptr.hbm [resolvable:$true] %s52
      %s54 = sshll.u32 [#allocation2], 4
      %s55 = int_to_ptr.vmem [resolvable:$true] %s54
      %57 = dma.hbm_to_vmem [thread:$0]  %s53, 16, %s55, [#allocation3]
    $region25: #{tpu_custom_call.1} parent=1 // pred_fallthru
      _
    // Predicated region
    $region26: #{tpu_custom_call.1} parent=1 // pred_check
      _
    $region27: #{tpu_custom_call.1} parent=1 // pred_check_branch
      %59 = sbr.rel (0) target = $region29
    $region28: #{tpu_custom_call.1} parent=1 // pred_region
      %61 = vsyncadd [#allocation6], 0
      %s63 = sshll.u32 %s6, 4
      %s64 = int_to_ptr.hbm [resolvable:$true] %s63
      %s65 = sshll.u32 [#allocation5], 4
      %s66 = int_to_ptr.vmem [resolvable:$true] %s65
      %68 = dma.hbm_to_vmem [thread:$0]  %s64, 16, %s66, [#allocation6]
    $region29: #{tpu_custom_call.1} parent=1 // pred_fallthru
      _
    // Predicated region
    $region30: #{tpu_custom_call.1} parent=1 // pred_check
      _
    $region31: #{tpu_custom_call.1} parent=1 // pred_check_branch
      %70 = sbr.rel (0) target = $region33
    $region32: #{tpu_custom_call.1} parent=1 // pred_region
      _
    $region33: #{tpu_custom_call.1} parent=1 // pred_fallthru
      _
    // Predicated region
    $region34: #{tpu_custom_call.1} parent=1 // pred_check
      _
    $region35: #{tpu_custom_call.1} parent=1 // pred_check_branch
      %72 = sbr.rel (0) target = $region37
    $region36: #{tpu_custom_call.1} parent=1 // pred_region
      _
    $region37: #{tpu_custom_call.1} parent=1 // pred_fallthru
      _
    // Predicated region
    $region38: #{tpu_custom_call.1} parent=1 // pred_check
      _
    $region39: #{tpu_custom_call.1} parent=1 // pred_check_branch
      %74 = sbr.rel (0) target = $region41
    $region40: #{tpu_custom_call.1} parent=1 // pred_region
      _
    $region41: #{tpu_custom_call.1} parent=1 // pred_fallthru
      _
    // Predicated region
    $region42: #{tpu_custom_call.1} parent=1 // pred_check
      _
    $region43: #{tpu_custom_call.1} parent=1 // pred_check_branch
      %76 = sbr.rel (0) target = $region45
    $region44: #{tpu_custom_call.1} parent=1 // pred_region
      _
    $region45: #{tpu_custom_call.1} parent=1 // pred_fallthru
      _
    // Predicated region
    $region46: #{tpu_custom_call.1} parent=1 // pred_check
      _
    $region47: #{tpu_custom_call.1} parent=1 // pred_check_branch
      %78 = sbr.rel (0) target = $region49
    $region48: #{tpu_custom_call.1} parent=1 // pred_region
      _
    $region49: #{tpu_custom_call.1} parent=1 // pred_fallthru
      _
    // Predicated region
    $region50: #{tpu_custom_call.1} parent=1 // pred_check
      _
    $region51: #{tpu_custom_call.1} parent=1 // pred_check_branch
      %80 = sbr.rel (0) target = $region53
    $region52: #{tpu_custom_call.1} parent=1 // pred_region
      _
    $region53: #{tpu_custom_call.1} parent=1 // pred_fallthru
      _
    // Predicated region
    $region54: #{tpu_custom_call.1} parent=1 // pred_check
      _
    $region55: #{tpu_custom_call.1} parent=1 // pred_check_branch
      %82 = sbr.rel (0) target = $region57
    $region56: #{tpu_custom_call.1} parent=1 // pred_region
      %84 = vsyncadd [#allocation6], 0
      %s85 = sshll.u32 %s13, 4
      %s86 = int_to_ptr.hbm [resolvable:$true] %s85
      %s87 = sshll.u32 [#allocation7], 4
      %s88 = int_to_ptr.vmem [resolvable:$true] %s87
      %93 = dma.hbm_to_vmem [thread:$0]  %s86, 1024, %s88, [#allocation6], 128, 128, 8
    $region57: #{tpu_custom_call.1} parent=1 // pred_fallthru
      _
    // Predicated region
    $region58: #{tpu_custom_call.1} parent=1 // pred_check
      _
    $region59: #{tpu_custom_call.1} parent=1 // pred_check_branch
      %95 = sbr.rel (0) target = $region61
    $region60: #{tpu_custom_call.1} parent=1 // pred_region
      _
    $region61: #{tpu_custom_call.1} parent=1 // pred_fallthru
      _
    // Predicated region
    $region62: #{tpu_custom_call.1} parent=1 // pred_check
      _
    $region63: #{tpu_custom_call.1} parent=1 // pred_check_branch
      %97 = sbr.rel (0) target = $region65
    $region64: #{tpu_custom_call.1} parent=1 // pred_region
      %99 = vsyncadd [#allocation9], 0
      %s100 = sshll.u32 %s15, 4
      %s101 = int_to_ptr.hbm [resolvable:$true] %s100
      %s102 = sshll.u32 [#allocation8], 4
      %s103 = int_to_ptr.vmem [resolvable:$true] %s102
      %108 = dma.hbm_to_vmem [thread:$0]  %s101, 32, %s103, [#allocation9], 16, 16, 1
    $region65: #{tpu_custom_call.1} parent=1 // pred_fallthru
      _
    // Predicated region
    $region66: #{tpu_custom_call.1} parent=1 // pred_check
      _
    $region67: #{tpu_custom_call.1} parent=1 // pred_check_branch
      %110 = sbr.rel (0) target = $region69
    $region68: #{tpu_custom_call.1} parent=1 // pred_region
      _
    $region69: #{tpu_custom_call.1} parent=1 // pred_fallthru
      _
    // Predicated region
    $region70: #{tpu_custom_call.1} parent=1 // pred_check
      _
    $region71: #{tpu_custom_call.1} parent=1 // pred_check_branch
      %112 = sbr.rel (0) target = $region73
    $region72: #{tpu_custom_call.1} parent=1 // pred_region
      %114 = vsyncadd [#allocation9], 0
      %s115 = sshll.u32 %s17, 4
      %s116 = int_to_ptr.hbm [resolvable:$true] %s115
      %s117 = sshll.u32 [#allocation10], 4
      %s118 = int_to_ptr.vmem [resolvable:$true] %s117
      %123 = dma.hbm_to_vmem [thread:$0]  %s116, 1024, %s118, [#allocation9], 128, 128, 8
    $region73: #{tpu_custom_call.1} parent=1 // pred_fallthru
      _
    // Predicated region
    $region74: #{tpu_custom_call.1} parent=1 // pred_check
      _
    $region75: #{tpu_custom_call.1} parent=1 // pred_check_branch
      %125 = sbr.rel (0) target = $region77
    $region76: #{tpu_custom_call.1} parent=1 // pred_region
      _
    $region77: #{tpu_custom_call.1} parent=1 // pred_fallthru
      _
    // Predicated region
    $region78: #{tpu_custom_call.1} parent=1 // pred_check
      _
    $region79: #{tpu_custom_call.1} parent=1 // pred_check_branch
      %127 = sbr.rel (0) target = $region81
    $region80: #{tpu_custom_call.1} parent=1 // pred_region
      _
    $region81: #{tpu_custom_call.1} parent=1 // pred_fallthru
      _
    // Predicated region
    $region82: #{tpu_custom_call.1} parent=1 // pred_check
      _
    $region83: #{tpu_custom_call.1} parent=1 // pred_check_branch
      %129 = sbr.rel (0) target = $region85
    $region84: #{tpu_custom_call.1} parent=1 // pred_region
      _
    $region85: #{tpu_custom_call.1} parent=1 // pred_fallthru
      _
    // Predicated region
    $region86: #{tpu_custom_call.1} parent=1 // pred_check
      _
    $region87: #{tpu_custom_call.1} parent=1 // pred_check_branch
      %131 = sbr.rel (0) target = $region89
    $region88: #{tpu_custom_call.1} parent=1 // pred_region
      _
    $region89: #{tpu_custom_call.1} parent=1 // pred_fallthru
      _
    // Predicated region
    $region90: #{tpu_custom_call.1} parent=1 // pred_check
      _
    $region91: #{tpu_custom_call.1} parent=1 // pred_check_branch
      %133 = sbr.rel (0) target = $region93
    $region92: #{tpu_custom_call.1} parent=1 // pred_region
      %135 = vsyncadd [#allocation12], 0
      %s136 = sshll.u32 %s22, 4
      %s137 = int_to_ptr.hbm [resolvable:$true] %s136
      %s138 = sshll.u32 [#allocation11], 4
      %s139 = int_to_ptr.vmem [resolvable:$true] %s138
      %144 = dma.hbm_to_vmem [thread:$0]  %s137, 32, %s139, [#allocation12], 16, 16, 1
    $region93: #{tpu_custom_call.1} parent=1 // pred_fallthru
      _
    // Predicated region
    $region94: #{tpu_custom_call.1} parent=1 // pred_check
      _
    $region95: #{tpu_custom_call.1} parent=1 // pred_check_branch
      %146 = sbr.rel (0) target = $region97
    $region96: #{tpu_custom_call.1} parent=1 // pred_region
      _
    $region97: #{tpu_custom_call.1} parent=1 // pred_fallthru
      _
    // Predicated region
    $region98: #{tpu_custom_call.1} parent=1 // pred_check
      _
    $region99: #{tpu_custom_call.1} parent=1 // pred_check_branch
      %148 = sbr.rel (0) target = $region101
    $region100: #{tpu_custom_call.1} parent=1 // pred_region
      _
    $region101: #{tpu_custom_call.1} parent=1 // pred_fallthru
      _
    // Predicated region
    $region102: #{tpu_custom_call.1} parent=1 // pred_check
      _
    $region103: #{tpu_custom_call.1} parent=1 // pred_check_branch
      %150 = sbr.rel (0) target = $region105
    $region104: #{tpu_custom_call.1} parent=1 // pred_region
      _
    $region105: #{tpu_custom_call.1} parent=1 // pred_fallthru
      _
    // Predicated region
    $region106: #{tpu_custom_call.1} parent=1 // pred_check
      _
    $region107: #{tpu_custom_call.1} parent=1 // pred_check_branch
      %152 = sbr.rel (0) target = $region109
    $region108: #{tpu_custom_call.1} parent=1 // pred_region
      _
    $region109: #{tpu_custom_call.1} parent=1 // pred_fallthru
      _
    // Predicated region
    $region110: #{tpu_custom_call.1} parent=1 // pred_check
      _
    $region111: #{tpu_custom_call.1} parent=1 // pred_check_branch
      %154 = sbr.rel (0) target = $region113
    $region112: #{tpu_custom_call.1} parent=1 // pred_region
      %156 = dma.done [#allocation3], 16
    $region113: #{tpu_custom_call.1} parent=1 // pred_fallthru
      _
    // Predicated region
    $region114: #{tpu_custom_call.1} parent=1 // pred_check
      _
    $region115: #{tpu_custom_call.1} parent=1 // pred_check_branch
      %158 = sbr.rel (0) target = $region117
    $region116: #{tpu_custom_call.1} parent=1 // pred_region
      %160 = dma.done [#allocation6], 16
    $region117: #{tpu_custom_call.1} parent=1 // pred_fallthru
      _
    // Predicated region
    $region118: #{tpu_custom_call.1} parent=1 // pred_check
      _
    $region119: #{tpu_custom_call.1} parent=1 // pred_check_branch
      %162 = sbr.rel (0) target = $region121
    $region120: #{tpu_custom_call.1} parent=1 // pred_region
      %164 = dma.done [#allocation6], 1024
    $region121: #{tpu_custom_call.1} parent=1 // pred_fallthru
      _
    // Predicated region
    $region122: #{tpu_custom_call.1} parent=1 // pred_check
      _
    $region123: #{tpu_custom_call.1} parent=1 // pred_check_branch
      %166 = sbr.rel (0) target = $region125
    $region124: #{tpu_custom_call.1} parent=1 // pred_region
      %168 = dma.done [#allocation9], 32
    $region125: #{tpu_custom_call.1} parent=1 // pred_fallthru
      _
    // Predicated region
    $region126: #{tpu_custom_call.1} parent=1 // pred_check
      _
    $region127: #{tpu_custom_call.1} parent=1 // pred_check_branch
      %170 = sbr.rel (0) target = $region129
    $region128: #{tpu_custom_call.1} parent=1 // pred_region
      %172 = dma.done [#allocation9], 1024
    $region129: #{tpu_custom_call.1} parent=1 // pred_fallthru
      _
    // Predicated region
    $region130: #{tpu_custom_call.1} parent=1 // pred_check
      _
    $region131: #{tpu_custom_call.1} parent=1 // pred_check_branch
      %174 = sbr.rel (0) target = $region133
    $region132: #{tpu_custom_call.1} parent=1 // pred_region
      %176 = dma.done [#allocation12], 32
    $region133: #{tpu_custom_call.1} parent=1 // pred_fallthru
      _
    %v177 = vld [vmem:[%s0] sm:$0xff]
    %v178 = vld [vmem:[%s0 + $0x8] sm:$0xff]
    %v179 = vlaneseq
    %v180 = vand.u32 %v179, 127
    %181 = vset.pattern.permute.xlu0 0
    %182 = vperm.xlu0 %181, %v177
    %v183 = vpop.permute.xlu0 %182
    %184 = vset.pattern.permute.xlu0 0
    %185 = vperm.xlu0 %184, %v178
    %v186 = vpop.permute.xlu0 %185
    %vm187 = vcmp.eq.s32.totalorder %v180, %v183
    %vm188 = vcmp.eq.s32.totalorder %v180, %v186
    %v189 = vsel %vm187, 1.0, 0.0
    %v190 = vsel %vm188, 1.0, 0.0
    %v191 = vld [vmem:[%s2] sm:$0xff]
    %v192 = vld [vmem:[%s2 + $0x8] sm:$0xff]
    %v193 = vld [vmem:[%s2 + $0x10] sm:$0xff]
    %v194 = vld [vmem:[%s2 + $0x18] sm:$0xff]
    %v195 = vld [vmem:[%s2 + $0x20] sm:$0xff]
    %v196 = vld [vmem:[%s2 + $0x28] sm:$0xff]
    %v197 = vld [vmem:[%s2 + $0x30] sm:$0xff]
    %v198 = vld [vmem:[%s2 + $0x38] sm:$0xff]
    %v199 = vld [vmem:[%s3] sm:$0xff]
    %v200 = vld [vmem:[%s4] sm:$0x3]
    %vm201 = vcmask 523264
    %v203 = vsel %vm201, %v189, 0
    %v206 = vsel %vm201, %v190, 0
    %208 = vmatpush.msra.mxu0 0.0
    %209 = vmatpush.msra.mxu0 0.0
    %210 = vmatpush.msra.mxu0 0.0
    %211 = vmatpush.msra.mxu0 0.0
    %212 = vmatpush.msra.mxu0 0.0
    %213 = vmatpush.msra.mxu0 0.0
    %214 = vmatpush.msra.mxu0 0.0
    %215 = vmatpush.msra.mxu0 0.0
    %216 = vmatpush.msra.mxu0 %v198
    %217 = vmatpush.msra.mxu0 %v197
    %218 = vmatpush.msra.mxu0 %v196
    %219 = vmatpush.msra.mxu0 %v195
    %220 = vmatpush.msra.mxu0 %v194
    %221 = vmatpush.msra.mxu0 %v193
    %222 = vmatpush.msra.mxu0 %v192
    %223 = vmatpush.msra.mxu0 %v191
    %224 = vmatmul.f32.gmra.mxu0 %v203
    %v225 = vpop.f32.mrf.mxu0
    %v226 = vadd.f32 %v199, %v225
    %227 = vmatmul.f32.gmra.mxu0 %v206
    %v228 = vpop.f32.mrf.mxu0
    %v229 = vadd.f32 %v199, %v228
    %230 = vdwg.mxu0
    %v231 = vperm.slane %v200, 0
    %v232 = vadd.f32 %v226, %v231
    %v233 = vadd.f32 %v229, %v231
    %v234 = vld [vmem:[#allocation2] sm:$0x1]
    %v235 = vld [vmem:[#allocation5] sm:$0x1]
    %vm236 = vcmask 261120
    %v237 = vsel %vm236, %v232, 0.0
    %238 = vadd.xlane.f32.xlu0 %v237
    %v239 = vpop.xlane.xlu0 %238
    %v240 = vsel %vm236, %v233, 0.0
    %241 = vadd.xlane.f32.xlu0 %v240
    %v242 = vpop.xlane.xlu0 %241
    %v243 = vrcp.pop 32.0
    %v244 = vmul.f32 32.0, %v243
    %v245 = vsub.f32 1.0, %v244
    %v246 = vmul.f32 %v243, %v245
    %v247 = vadd.f32 %v243, %v246
    %vm248 = vweird.f32 %v243
    %v249 = vsel %vm248, %v243, %v247
    %v250 = vmul.f32 %v239, %v249
    %v251 = vmul.f32 %v242, %v249
    %v252 = vsub.f32 %v232, %v250
    %v253 = vsub.f32 %v233, %v251
    %v254 = vmul.f32 %v252, %v252
    %v255 = vmul.f32 %v253, %v253
    %v256 = vsel %vm236, %v254, 0.0
    %257 = vadd.xlane.f32.xlu0 %v256
    %v258 = vpop.xlane.xlu0 %257
    %v259 = vsel %vm236, %v255, 0.0
    %260 = vadd.xlane.f32.xlu0 %v259
    %v261 = vpop.xlane.xlu0 %260
    %v262 = vmul.f32 %v258, %v249
    %v263 = vmul.f32 %v261, %v249
    %v264 = vadd.f32 %v262, 1e-12
    %v265 = vadd.f32 %v263, 1e-12
    %v266 = vrsqrt.pop %v264
    %v267 = vmul.f32 %v266, %v264
    %v268 = vmul.f32 %v267, %v266
    %v269 = vmul.f32 0.5, %v268
    %v270 = vsub.f32 1.5, %v269
    %v271 = vmul.f32 %v266, %v270
    %vm272 = vweird.f32 %v264
    %vm273 = vweird.f32 %v266
    %vm274 = vmor %vm272, %vm273
    %v275 = vsel %vm274, %v266, %v271
    %v276 = vrsqrt.pop %v265
    %v277 = vmul.f32 %v276, %v265
    %v278 = vmul.f32 %v277, %v276
    %v279 = vmul.f32 0.5, %v278
    %v280 = vsub.f32 1.5, %v279
    %v281 = vmul.f32 %v276, %v280
    %vm282 = vweird.f32 %v265
    %vm283 = vweird.f32 %v276
    %vm284 = vmor %vm282, %vm283
    %v285 = vsel %vm284, %v276, %v281
    %v286 = vmul.f32 %v252, %v275
    %v287 = vmul.f32 %v253, %v285
    %v289 = vperm.slane %v234, 0
    %v291 = vmul.f32 %v286, %v289
    %v292 = vmul.f32 %v287, %v289
    %v294 = vperm.slane %v235, 0
    %v296 = vadd.f32 %v291, %v294
    %v297 = vadd.f32 %v292, %v294
    %v298 = vld [vmem:[%s1] sm:$0x3]
    %v299 = vsub.f32 1.0, %v298
    %v300 = vmul.f32 %v299, -1e+09
    %v302 = vrot.slane %v300, 6
    %v304 = vrot.slane %v300, 4
    %v306 = vrot.slane %v300, 2
    %vm308 = vcmask 1041408
    %v309 = vsel %vm308, %v300, %v302
    %vm310 = vcmask 1043456
    %v311 = vsel %vm310, %v309, %v304
    %vm312 = vcmask 1045504
    %v313 = vsel %vm312, %v311, %v306
    %v315 = vrot.slane %v313, 1
    %v316 = vrot.slane %v313, 2
    %v317 = vrot.slane %v313, 3
    %v318 = vrot.slane %v313, 4
    %v319 = vrot.slane %v313, 5
    %v320 = vrot.slane %v313, 6
    %v321 = vrot.slane %v313, 7
    %v322 = vld [vmem:[%s7] sm:$0xff]
    %v323 = vld [vmem:[%s7 + $0x8] sm:$0xff]
    %v324 = vld [vmem:[%s7 + $0x10] sm:$0xff]
    %v325 = vld [vmem:[%s7 + $0x18] sm:$0xff]
    %v326 = vld [vmem:[%s8] sm:$0x1]
    %v328 = vperm.slane %v326, 0
    %v331 = vsel %vm236, %v296, 0
    %v334 = vsel %vm236, %v297, 0
    %336 = vmatpush.msra.mxu0 0.0
    %337 = vmatpush.msra.mxu0 0.0
    %338 = vmatpush.msra.mxu0 0.0
    %339 = vmatpush.msra.mxu0 0.0
    %340 = vmatpush.msra.mxu0 0.0
    %341 = vmatpush.msra.mxu0 0.0
    %342 = vmatpush.msra.mxu0 0.0
    %343 = vmatpush.msra.mxu0 0.0
    %344 = vmatpush.msra.mxu0 0.0
    %345 = vmatpush.msra.mxu0 0.0
    %346 = vmatpush.msra.mxu0 0.0
    %347 = vmatpush.msra.mxu0 0.0
    %348 = vmatpush.msra.mxu0 %v325
    %349 = vmatpush.msra.mxu0 %v324
    %350 = vmatpush.msra.mxu0 %v323
    %351 = vmatpush.msra.mxu0 %v322
    %352 = vmatmul.f32.gmra.mxu0 %v331
    %v353 = vpop.f32.mrf.mxu0
    %v354 = vadd.f32 %v328, %v353
    %355 = vmatmul.f32.gmra.mxu0 %v334
    %v356 = vpop.f32.mrf.mxu0
    %v357 = vadd.f32 %v328, %v356
    %358 = vdwg.mxu0
    %v359 = vld [vmem:[%s9] sm:$0xff]
    %v360 = vld [vmem:[%s9 + $0x8] sm:$0xff]
    %v361 = vld [vmem:[%s9 + $0x10] sm:$0xff]
    %v362 = vld [vmem:[%s9 + $0x18] sm:$0xff]
    %v363 = vld [vmem:[%s10] sm:$0x1]
    %v365 = vperm.slane %v363, 0
    %367 = vmatpush.msra.mxu0 0.0
    %368 = vmatpush.msra.mxu0 0.0
    %369 = vmatpush.msra.mxu0 0.0
    %370 = vmatpush.msra.mxu0 0.0
    %371 = vmatpush.msra.mxu0 0.0
    %372 = vmatpush.msra.mxu0 0.0
    %373 = vmatpush.msra.mxu0 0.0
    %374 = vmatpush.msra.mxu0 0.0
    %375 = vmatpush.msra.mxu0 0.0
    %376 = vmatpush.msra.mxu0 0.0
    %377 = vmatpush.msra.mxu0 0.0
    %378 = vmatpush.msra.mxu0 0.0
    %379 = vmatpush.msra.mxu0 %v362
    %380 = vmatpush.msra.mxu0 %v361
    %381 = vmatpush.msra.mxu0 %v360
    %382 = vmatpush.msra.mxu0 %v359
    %383 = vmatmul.f32.gmra.mxu0 %v331
    %v384 = vpop.f32.mrf.mxu0
    %v385 = vadd.f32 %v365, %v384
    %386 = vmatmul.f32.gmra.mxu0 %v334
    %v387 = vpop.f32.mrf.mxu0
    %v388 = vadd.f32 %v365, %v387
    %389 = vdwg.mxu0
    %v390 = vld [vmem:[%s11] sm:$0xff]
    %v391 = vld [vmem:[%s11 + $0x8] sm:$0xff]
    %v392 = vld [vmem:[%s11 + $0x10] sm:$0xff]
    %v393 = vld [vmem:[%s11 + $0x18] sm:$0xff]
    %v394 = vld [vmem:[%s12] sm:$0x1]
    %v396 = vperm.slane %v394, 0
    %398 = vmatpush.msra.mxu0 0.0
    %399 = vmatpush.msra.mxu0 0.0
    %400 = vmatpush.msra.mxu0 0.0
    %401 = vmatpush.msra.mxu0 0.0
    %402 = vmatpush.msra.mxu0 0.0
    %403 = vmatpush.msra.mxu0 0.0
    %404 = vmatpush.msra.mxu0 0.0
    %405 = vmatpush.msra.mxu0 0.0
    %406 = vmatpush.msra.mxu0 0.0
    %407 = vmatpush.msra.mxu0 0.0
    %408 = vmatpush.msra.mxu0 0.0
    %409 = vmatpush.msra.mxu0 0.0
    %410 = vmatpush.msra.mxu0 %v393
    %411 = vmatpush.msra.mxu0 %v392
    %412 = vmatpush.msra.mxu0 %v391
    %413 = vmatpush.msra.mxu0 %v390
    %414 = vmatmul.f32.gmra.mxu0 %v331
    %v415 = vpop.f32.mrf.mxu0
    %v416 = vadd.f32 %v396, %v415
    %417 = vmatmul.f32.gmra.mxu0 %v334
    %v418 = vpop.f32.mrf.mxu0
    %v419 = vadd.f32 %v396, %v418
    %420 = vdwg.mxu0
    %423 = vrot.lane.b32.xlu0 %v354, 120
    %v424 = vpop.permute.xlu0 %423
    %425 = vrot.lane.b32.xlu0 %v357, 120
    %v426 = vpop.permute.xlu0 %425
    %427 = vrot.lane.b32.xlu0 %v354, 112
    %v428 = vpop.permute.xlu0 %427
    %429 = vrot.lane.b32.xlu0 %v357, 112
    %v430 = vpop.permute.xlu0 %429
    %431 = vrot.lane.b32.xlu0 %v354, 104
    %v432 = vpop.permute.xlu0 %431
    %433 = vrot.lane.b32.xlu0 %v357, 104
    %v434 = vpop.permute.xlu0 %433
    %437 = vrot.lane.b32.xlu0 %v385, 120
    %v438 = vpop.permute.xlu0 %437
    %439 = vrot.lane.b32.xlu0 %v388, 120
    %v440 = vpop.permute.xlu0 %439
    %441 = vrot.lane.b32.xlu0 %v385, 112
    %v442 = vpop.permute.xlu0 %441
    %443 = vrot.lane.b32.xlu0 %v388, 112
    %v444 = vpop.permute.xlu0 %443
    %445 = vrot.lane.b32.xlu0 %v385, 104
    %v446 = vpop.permute.xlu0 %445
    %447 = vrot.lane.b32.xlu0 %v388, 104
    %v448 = vpop.permute.xlu0 %447
    %451 = vrot.lane.b32.xlu0 %v416, 120
    %v452 = vpop.permute.xlu0 %451
    %453 = vrot.lane.b32.xlu0 %v419, 120
    %v454 = vpop.permute.xlu0 %453
    %457 = vrot.lane.b32.xlu0 %v416, 112
    %v458 = vpop.permute.xlu0 %457
    %459 = vrot.lane.b32.xlu0 %v419, 112
    %v460 = vpop.permute.xlu0 %459
    %463 = vrot.lane.b32.xlu0 %v416, 104
    %v464 = vpop.permute.xlu0 %463
    %465 = vrot.lane.b32.xlu0 %v419, 104
    %v466 = vpop.permute.xlu0 %465
    %vm469 = vcmask 64512
    %v470 = vsel %vm469, %v354, 0
    %v472 = vsel %vm469, %v385, 0
    %474 = vmatpush.xpose.msra.mxu0 0.0
    %475 = vmatpush.xpose.msra.mxu0 0.0
    %476 = vmatpush.xpose.msra.mxu0 0.0
    %477 = vmatpush.xpose.msra.mxu0 0.0
    %478 = vmatpush.xpose.msra.mxu0 0.0
    %479 = vmatpush.xpose.msra.mxu0 0.0
    %480 = vmatpush.xpose.msra.mxu0 0.0
    %481 = vmatpush.xpose.msra.mxu0 0.0
    %482 = vmatpush.xpose.msra.mxu0 0.0
    %483 = vmatpush.xpose.msra.mxu0 0.0
    %484 = vmatpush.xpose.msra.mxu0 0.0
    %485 = vmatpush.xpose.msra.mxu0 0.0
    %486 = vmatpush.xpose.msra.mxu0 0.0
    %487 = vmatpush.xpose.msra.mxu0 0.0
    %488 = vmatpush.xpose.msra.mxu0 0.0
    %489 = vmatpush.xpose.msra.mxu0 %v472
    %490 = vmatmul.f32.gmra.mxu0 %v470
    %v491 = vpop.f32.mrf.mxu0
    %v492 = vadd.f32 0.0, %v491
    %493 = vdwg.mxu0
    %v494 = vsel %vm469, %v357, 0
    %v496 = vsel %vm469, %v388, 0
    %498 = vmatpush.xpose.msra.mxu0 0.0
    %499 = vmatpush.xpose.msra.mxu0 0.0
    %500 = vmatpush.xpose.msra.mxu0 0.0
    %501 = vmatpush.xpose.msra.mxu0 0.0
    %502 = vmatpush.xpose.msra.mxu0 0.0
    %503 = vmatpush.xpose.msra.mxu0 0.0
    %504 = vmatpush.xpose.msra.mxu0 0.0
    %505 = vmatpush.xpose.msra.mxu0 0.0
    %506 = vmatpush.xpose.msra.mxu0 0.0
    %507 = vmatpush.xpose.msra.mxu0 0.0
    %508 = vmatpush.xpose.msra.mxu0 0.0
    %509 = vmatpush.xpose.msra.mxu0 0.0
    %510 = vmatpush.xpose.msra.mxu0 0.0
    %511 = vmatpush.xpose.msra.mxu0 0.0
    %512 = vmatpush.xpose.msra.mxu0 0.0
    %513 = vmatpush.xpose.msra.mxu0 %v496
    %514 = vmatmul.f32.gmra.mxu0 %v494
    %v515 = vpop.f32.mrf.mxu0
    %v516 = vadd.f32 0.0, %v515
    %517 = vdwg.mxu0
    %v518 = vsel %vm469, %v424, 0
    %v520 = vsel %vm469, %v438, 0
    %522 = vmatpush.xpose.msra.mxu0 0.0
    %523 = vmatpush.xpose.msra.mxu0 0.0
    %524 = vmatpush.xpose.msra.mxu0 0.0
    %525 = vmatpush.xpose.msra.mxu0 0.0
    %526 = vmatpush.xpose.msra.mxu0 0.0
    %527 = vmatpush.xpose.msra.mxu0 0.0
    %528 = vmatpush.xpose.msra.mxu0 0.0
    %529 = vmatpush.xpose.msra.mxu0 0.0
    %530 = vmatpush.xpose.msra.mxu0 0.0
    %531 = vmatpush.xpose.msra.mxu0 0.0
    %532 = vmatpush.xpose.msra.mxu0 0.0
    %533 = vmatpush.xpose.msra.mxu0 0.0
    %534 = vmatpush.xpose.msra.mxu0 0.0
    %535 = vmatpush.xpose.msra.mxu0 0.0
    %536 = vmatpush.xpose.msra.mxu0 0.0
    %537 = vmatpush.xpose.msra.mxu0 %v520
    %538 = vmatmul.f32.gmra.mxu0 %v518
    %v539 = vpop.f32.mrf.mxu0
    %v540 = vadd.f32 0.0, %v539
    %541 = vdwg.mxu0
    %v542 = vsel %vm469, %v426, 0
    %v544 = vsel %vm469, %v440, 0
    %546 = vmatpush.xpose.msra.mxu0 0.0
    %547 = vmatpush.xpose.msra.mxu0 0.0
    %548 = vmatpush.xpose.msra.mxu0 0.0
    %549 = vmatpush.xpose.msra.mxu0 0.0
    %550 = vmatpush.xpose.msra.mxu0 0.0
    %551 = vmatpush.xpose.msra.mxu0 0.0
    %552 = vmatpush.xpose.msra.mxu0 0.0
    %553 = vmatpush.xpose.msra.mxu0 0.0
    %554 = vmatpush.xpose.msra.mxu0 0.0
    %555 = vmatpush.xpose.msra.mxu0 0.0
    %556 = vmatpush.xpose.msra.mxu0 0.0
    %557 = vmatpush.xpose.msra.mxu0 0.0
    %558 = vmatpush.xpose.msra.mxu0 0.0
    %559 = vmatpush.xpose.msra.mxu0 0.0
    %560 = vmatpush.xpose.msra.mxu0 0.0
    %561 = vmatpush.xpose.msra.mxu0 %v544
    %562 = vmatmul.f32.gmra.mxu0 %v542
    %v563 = vpop.f32.mrf.mxu0
    %v564 = vadd.f32 0.0, %v563
    %565 = vdwg.mxu0
    %v566 = vsel %vm469, %v428, 0
    %v568 = vsel %vm469, %v442, 0
    %570 = vmatpush.xpose.msra.mxu0 0.0
    %571 = vmatpush.xpose.msra.mxu0 0.0
    %572 = vmatpush.xpose.msra.mxu0 0.0
    %573 = vmatpush.xpose.msra.mxu0 0.0
    %574 = vmatpush.xpose.msra.mxu0 0.0
    %575 = vmatpush.xpose.msra.mxu0 0.0
    %576 = vmatpush.xpose.msra.mxu0 0.0
    %577 = vmatpush.xpose.msra.mxu0 0.0
    %578 = vmatpush.xpose.msra.mxu0 0.0
    %579 = vmatpush.xpose.msra.mxu0 0.0
    %580 = vmatpush.xpose.msra.mxu0 0.0
    %581 = vmatpush.xpose.msra.mxu0 0.0
    %582 = vmatpush.xpose.msra.mxu0 0.0
    %583 = vmatpush.xpose.msra.mxu0 0.0
    %584 = vmatpush.xpose.msra.mxu0 0.0
    %585 = vmatpush.xpose.msra.mxu0 %v568
    %586 = vmatmul.f32.gmra.mxu0 %v566
    %v587 = vpop.f32.mrf.mxu0
    %v588 = vadd.f32 0.0, %v587
    %589 = vdwg.mxu0
    %v590 = vsel %vm469, %v430, 0
    %v592 = vsel %vm469, %v444, 0
    %594 = vmatpush.xpose.msra.mxu0 0.0
    %595 = vmatpush.xpose.msra.mxu0 0.0
    %596 = vmatpush.xpose.msra.mxu0 0.0
    %597 = vmatpush.xpose.msra.mxu0 0.0
    %598 = vmatpush.xpose.msra.mxu0 0.0
    %599 = vmatpush.xpose.msra.mxu0 0.0
    %600 = vmatpush.xpose.msra.mxu0 0.0
    %601 = vmatpush.xpose.msra.mxu0 0.0
    %602 = vmatpush.xpose.msra.mxu0 0.0
    %603 = vmatpush.xpose.msra.mxu0 0.0
    %604 = vmatpush.xpose.msra.mxu0 0.0
    %605 = vmatpush.xpose.msra.mxu0 0.0
    %606 = vmatpush.xpose.msra.mxu0 0.0
    %607 = vmatpush.xpose.msra.mxu0 0.0
    %608 = vmatpush.xpose.msra.mxu0 0.0
    %609 = vmatpush.xpose.msra.mxu0 %v592
    %610 = vmatmul.f32.gmra.mxu0 %v590
    %v611 = vpop.f32.mrf.mxu0
    %v612 = vadd.f32 0.0, %v611
    %613 = vdwg.mxu0
    %v614 = vsel %vm469, %v432, 0
    %v616 = vsel %vm469, %v446, 0
    %618 = vmatpush.xpose.msra.mxu0 0.0
    %619 = vmatpush.xpose.msra.mxu0 0.0
    %620 = vmatpush.xpose.msra.mxu0 0.0
    %621 = vmatpush.xpose.msra.mxu0 0.0
    %622 = vmatpush.xpose.msra.mxu0 0.0
    %623 = vmatpush.xpose.msra.mxu0 0.0
    %624 = vmatpush.xpose.msra.mxu0 0.0
    %625 = vmatpush.xpose.msra.mxu0 0.0
    %626 = vmatpush.xpose.msra.mxu0 0.0
    %627 = vmatpush.xpose.msra.mxu0 0.0
    %628 = vmatpush.xpose.msra.mxu0 0.0
    %629 = vmatpush.xpose.msra.mxu0 0.0
    %630 = vmatpush.xpose.msra.mxu0 0.0
    %631 = vmatpush.xpose.msra.mxu0 0.0
    %632 = vmatpush.xpose.msra.mxu0 0.0
    %633 = vmatpush.xpose.msra.mxu0 %v616
    %634 = vmatmul.f32.gmra.mxu0 %v614
    %v635 = vpop.f32.mrf.mxu0
    %v636 = vadd.f32 0.0, %v635
    %637 = vdwg.mxu0
    %v638 = vsel %vm469, %v434, 0
    %v640 = vsel %vm469, %v448, 0
    %642 = vmatpush.xpose.msra.mxu0 0.0
    %643 = vmatpush.xpose.msra.mxu0 0.0
    %644 = vmatpush.xpose.msra.mxu0 0.0
    %645 = vmatpush.xpose.msra.mxu0 0.0
    %646 = vmatpush.xpose.msra.mxu0 0.0
    %647 = vmatpush.xpose.msra.mxu0 0.0
    %648 = vmatpush.xpose.msra.mxu0 0.0
    %649 = vmatpush.xpose.msra.mxu0 0.0
    %650 = vmatpush.xpose.msra.mxu0 0.0
    %651 = vmatpush.xpose.msra.mxu0 0.0
    %652 = vmatpush.xpose.msra.mxu0 0.0
    %653 = vmatpush.xpose.msra.mxu0 0.0
    %654 = vmatpush.xpose.msra.mxu0 0.0
    %655 = vmatpush.xpose.msra.mxu0 0.0
    %656 = vmatpush.xpose.msra.mxu0 0.0
    %657 = vmatpush.xpose.msra.mxu0 %v640
    %658 = vmatmul.f32.gmra.mxu0 %v638
    %v659 = vpop.f32.mrf.mxu0
    %v660 = vadd.f32 0.0, %v659
    %661 = vdwg.mxu0
    %v662 = vmul.f32 %v492, 0.35355338
    %v663 = vmul.f32 %v516, 0.35355338
    %v664 = vmul.f32 %v540, 0.35355338
    %v665 = vmul.f32 %v564, 0.35355338
    %v666 = vmul.f32 %v588, 0.35355338
    %v667 = vmul.f32 %v612, 0.35355338
    %v668 = vmul.f32 %v636, 0.35355338
    %v669 = vmul.f32 %v660, 0.35355338
    %v670 = vperm.slane %v313, 0
    %v671 = vperm.slane %v315, 0
    %v672 = vperm.slane %v316, 0
    %v673 = vperm.slane %v317, 0
    %v674 = vperm.slane %v318, 0
    %v675 = vperm.slane %v319, 0
    %v676 = vperm.slane %v320, 0
    %v677 = vperm.slane %v321, 0
    %v686 = vadd.f32 %v662, %v670
    %v687 = vadd.f32 %v663, %v671
    %v688 = vadd.f32 %v664, %v672
    %v689 = vadd.f32 %v665, %v673
    %v690 = vadd.f32 %v666, %v674
    %v691 = vadd.f32 %v667, %v675
    %v692 = vadd.f32 %v668, %v676
    %v693 = vadd.f32 %v669, %v677
    %v694 = vsel %vm469, %v686, -inf
    %695 = vmax.xlane.f32.xlu0 %v694
    %v696 = vpop.xlane.xlu0 %695
    %v697 = vsel %vm469, %v687, -inf
    %698 = vmax.xlane.f32.xlu0 %v697
    %v699 = vpop.xlane.xlu0 %698
    %v700 = vsel %vm469, %v688, -inf
    %701 = vmax.xlane.f32.xlu0 %v700
    %v702 = vpop.xlane.xlu0 %701
    %v703 = vsel %vm469, %v689, -inf
    %704 = vmax.xlane.f32.xlu0 %v703
    %v705 = vpop.xlane.xlu0 %704
    %v706 = vsel %vm469, %v690, -inf
    %707 = vmax.xlane.f32.xlu0 %v706
    %v708 = vpop.xlane.xlu0 %707
    %v709 = vsel %vm469, %v691, -inf
    %710 = vmax.xlane.f32.xlu0 %v709
    %v711 = vpop.xlane.xlu0 %710
    %v712 = vsel %vm469, %v692, -inf
    %713 = vmax.xlane.f32.xlu0 %v712
    %v714 = vpop.xlane.xlu0 %713
    %v715 = vsel %vm469, %v693, -inf
    %716 = vmax.xlane.f32.xlu0 %v715
    %v717 = vpop.xlane.xlu0 %716
    %v718 = vsub.f32 %v686, %v696
    %v719 = vsub.f32 %v687, %v699
    %v720 = vsub.f32 %v688, %v702
    %v721 = vsub.f32 %v689, %v705
    %v722 = vsub.f32 %v690, %v708
    %v723 = vsub.f32 %v691, %v711
    %v724 = vsub.f32 %v692, %v714
    %v725 = vsub.f32 %v693, %v717
    %v726 = vmul.f32 %v718, 1.442695
    %v727 = vpow.pop %v726
    %v728 = vmul.f32 %v719, 1.442695
    %v729 = vpow.pop %v728
    %v730 = vmul.f32 %v720, 1.442695
    %v731 = vpow.pop %v730
    %v732 = vmul.f32 %v721, 1.442695
    %v733 = vpow.pop %v732
    %v734 = vmul.f32 %v722, 1.442695
    %v735 = vpow.pop %v734
    %v736 = vmul.f32 %v723, 1.442695
    %v737 = vpow.pop %v736
    %v738 = vmul.f32 %v724, 1.442695
    %v739 = vpow.pop %v738
    %v740 = vmul.f32 %v725, 1.442695
    %v741 = vpow.pop %v740
    %v742 = vsel %vm469, %v727, 0.0
    %743 = vadd.xlane.f32.xlu0 %v742
    %v744 = vpop.xlane.xlu0 %743
    %v745 = vsel %vm469, %v729, 0.0
    %746 = vadd.xlane.f32.xlu0 %v745
    %v747 = vpop.xlane.xlu0 %746
    %v748 = vsel %vm469, %v731, 0.0
    %749 = vadd.xlane.f32.xlu0 %v748
    %v750 = vpop.xlane.xlu0 %749
    %v751 = vsel %vm469, %v733, 0.0
    %752 = vadd.xlane.f32.xlu0 %v751
    %v753 = vpop.xlane.xlu0 %752
    %v754 = vsel %vm469, %v735, 0.0
    %755 = vadd.xlane.f32.xlu0 %v754
    %v756 = vpop.xlane.xlu0 %755
    %v757 = vsel %vm469, %v737, 0.0
    %758 = vadd.xlane.f32.xlu0 %v757
    %v759 = vpop.xlane.xlu0 %758
    %v760 = vsel %vm469, %v739, 0.0
    %761 = vadd.xlane.f32.xlu0 %v760
    %v762 = vpop.xlane.xlu0 %761
    %v763 = vsel %vm469, %v741, 0.0
    %764 = vadd.xlane.f32.xlu0 %v763
    %v765 = vpop.xlane.xlu0 %764
    %v766 = vrcp.pop %v744
    %v767 = vrcp.pop %v747
    %v768 = vrcp.pop %v750
    %v769 = vrcp.pop %v753
    %v770 = vrcp.pop %v756
    %v771 = vrcp.pop %v759
    %v772 = vrcp.pop %v762
    %v773 = vrcp.pop %v765
    %v774 = vmul.f32 %v727, %v766
    %v775 = vmul.f32 %v729, %v767
    %v776 = vmul.f32 %v731, %v768
    %v777 = vmul.f32 %v733, %v769
    %v778 = vmul.f32 %v735, %v770
    %v779 = vmul.f32 %v737, %v771
    %v780 = vmul.f32 %v739, %v772
    %v781 = vmul.f32 %v741, %v773
    %v783 = vsel %vm469, %v774, 0
    %785 = vmatpush.msra.mxu0 0.0
    %786 = vmatpush.msra.mxu0 0.0
    %787 = vmatpush.msra.mxu0 0.0
    %788 = vmatpush.msra.mxu0 0.0
    %789 = vmatpush.msra.mxu0 0.0
    %790 = vmatpush.msra.mxu0 0.0
    %791 = vmatpush.msra.mxu0 0.0
    %792 = vmatpush.msra.mxu0 0.0
    %793 = vmatpush.msra.mxu0 0.0
    %794 = vmatpush.msra.mxu0 0.0
    %795 = vmatpush.msra.mxu0 0.0
    %796 = vmatpush.msra.mxu0 0.0
    %797 = vmatpush.msra.mxu0 0.0
    %798 = vmatpush.msra.mxu0 0.0
    %799 = vmatpush.msra.mxu0 0.0
    %800 = vmatpush.msra.mxu0 %v416
    %801 = vmatmul.f32.gmra.mxu0 %v783
    %v802 = vpop.f32.mrf.mxu0
    %v803 = vadd.f32 0.0, %v802
    %804 = vdwg.mxu0
    %v806 = vsel %vm469, %v775, 0
    %808 = vmatpush.msra.mxu0 0.0
    %809 = vmatpush.msra.mxu0 0.0
    %810 = vmatpush.msra.mxu0 0.0
    %811 = vmatpush.msra.mxu0 0.0
    %812 = vmatpush.msra.mxu0 0.0
    %813 = vmatpush.msra.mxu0 0.0
    %814 = vmatpush.msra.mxu0 0.0
    %815 = vmatpush.msra.mxu0 0.0
    %816 = vmatpush.msra.mxu0 0.0
    %817 = vmatpush.msra.mxu0 0.0
    %818 = vmatpush.msra.mxu0 0.0
    %819 = vmatpush.msra.mxu0 0.0
    %820 = vmatpush.msra.mxu0 0.0
    %821 = vmatpush.msra.mxu0 0.0
    %822 = vmatpush.msra.mxu0 0.0
    %823 = vmatpush.msra.mxu0 %v419
    %824 = vmatmul.f32.gmra.mxu0 %v806
    %v825 = vpop.f32.mrf.mxu0
    %v826 = vadd.f32 0.0, %v825
    %827 = vdwg.mxu0
    %v829 = vsel %vm469, %v776, 0
    %831 = vmatpush.msra.mxu0 0.0
    %832 = vmatpush.msra.mxu0 0.0
    %833 = vmatpush.msra.mxu0 0.0
    %834 = vmatpush.msra.mxu0 0.0
    %835 = vmatpush.msra.mxu0 0.0
    %836 = vmatpush.msra.mxu0 0.0
    %837 = vmatpush.msra.mxu0 0.0
    %838 = vmatpush.msra.mxu0 0.0
    %839 = vmatpush.msra.mxu0 0.0
    %840 = vmatpush.msra.mxu0 0.0
    %841 = vmatpush.msra.mxu0 0.0
    %842 = vmatpush.msra.mxu0 0.0
    %843 = vmatpush.msra.mxu0 0.0
    %844 = vmatpush.msra.mxu0 0.0
    %845 = vmatpush.msra.mxu0 0.0
    %846 = vmatpush.msra.mxu0 %v452
    %847 = vmatmul.f32.gmra.mxu0 %v829
    %v848 = vpop.f32.mrf.mxu0
    %v849 = vadd.f32 0.0, %v848
    %850 = vdwg.mxu0
    %v852 = vsel %vm469, %v777, 0
    %854 = vmatpush.msra.mxu0 0.0
    %855 = vmatpush.msra.mxu0 0.0
    %856 = vmatpush.msra.mxu0 0.0
    %857 = vmatpush.msra.mxu0 0.0
    %858 = vmatpush.msra.mxu0 0.0
    %859 = vmatpush.msra.mxu0 0.0
    %860 = vmatpush.msra.mxu0 0.0
    %861 = vmatpush.msra.mxu0 0.0
    %862 = vmatpush.msra.mxu0 0.0
    %863 = vmatpush.msra.mxu0 0.0
    %864 = vmatpush.msra.mxu0 0.0
    %865 = vmatpush.msra.mxu0 0.0
    %866 = vmatpush.msra.mxu0 0.0
    %867 = vmatpush.msra.mxu0 0.0
    %868 = vmatpush.msra.mxu0 0.0
    %869 = vmatpush.msra.mxu0 %v454
    %870 = vmatmul.f32.gmra.mxu0 %v852
    %v871 = vpop.f32.mrf.mxu0
    %v872 = vadd.f32 0.0, %v871
    %873 = vdwg.mxu0
    %v875 = vsel %vm469, %v778, 0
    %877 = vmatpush.msra.mxu0 0.0
    %878 = vmatpush.msra.mxu0 0.0
    %879 = vmatpush.msra.mxu0 0.0
    %880 = vmatpush.msra.mxu0 0.0
    %881 = vmatpush.msra.mxu0 0.0
    %882 = vmatpush.msra.mxu0 0.0
    %883 = vmatpush.msra.mxu0 0.0
    %884 = vmatpush.msra.mxu0 0.0
    %885 = vmatpush.msra.mxu0 0.0
    %886 = vmatpush.msra.mxu0 0.0
    %887 = vmatpush.msra.mxu0 0.0
    %888 = vmatpush.msra.mxu0 0.0
    %889 = vmatpush.msra.mxu0 0.0
    %890 = vmatpush.msra.mxu0 0.0
    %891 = vmatpush.msra.mxu0 0.0
    %892 = vmatpush.msra.mxu0 %v458
    %893 = vmatmul.f32.gmra.mxu0 %v875
    %v894 = vpop.f32.mrf.mxu0
    %v895 = vadd.f32 0.0, %v894
    %896 = vdwg.mxu0
    %v898 = vsel %vm469, %v779, 0
    %900 = vmatpush.msra.mxu0 0.0
    %901 = vmatpush.msra.mxu0 0.0
    %902 = vmatpush.msra.mxu0 0.0
    %903 = vmatpush.msra.mxu0 0.0
    %904 = vmatpush.msra.mxu0 0.0
    %905 = vmatpush.msra.mxu0 0.0
    %906 = vmatpush.msra.mxu0 0.0
    %907 = vmatpush.msra.mxu0 0.0
    %908 = vmatpush.msra.mxu0 0.0
    %909 = vmatpush.msra.mxu0 0.0
    %910 = vmatpush.msra.mxu0 0.0
    %911 = vmatpush.msra.mxu0 0.0
    %912 = vmatpush.msra.mxu0 0.0
    %913 = vmatpush.msra.mxu0 0.0
    %914 = vmatpush.msra.mxu0 0.0
    %915 = vmatpush.msra.mxu0 %v460
    %916 = vmatmul.f32.gmra.mxu0 %v898
    %v917 = vpop.f32.mrf.mxu0
    %v918 = vadd.f32 0.0, %v917
    %919 = vdwg.mxu0
    %v921 = vsel %vm469, %v780, 0
    %923 = vmatpush.msra.mxu0 0.0
    %924 = vmatpush.msra.mxu0 0.0
    %925 = vmatpush.msra.mxu0 0.0
    %926 = vmatpush.msra.mxu0 0.0
    %927 = vmatpush.msra.mxu0 0.0
    %928 = vmatpush.msra.mxu0 0.0
    %929 = vmatpush.msra.mxu0 0.0
    %930 = vmatpush.msra.mxu0 0.0
    %931 = vmatpush.msra.mxu0 0.0
    %932 = vmatpush.msra.mxu0 0.0
    %933 = vmatpush.msra.mxu0 0.0
    %934 = vmatpush.msra.mxu0 0.0
    %935 = vmatpush.msra.mxu0 0.0
    %936 = vmatpush.msra.mxu0 0.0
    %937 = vmatpush.msra.mxu0 0.0
    %938 = vmatpush.msra.mxu0 %v464
    %939 = vmatmul.f32.gmra.mxu0 %v921
    %v940 = vpop.f32.mrf.mxu0
    %v941 = vadd.f32 0.0, %v940
    %942 = vdwg.mxu0
    %v944 = vsel %vm469, %v781, 0
    %946 = vmatpush.msra.mxu0 0.0
    %947 = vmatpush.msra.mxu0 0.0
    %948 = vmatpush.msra.mxu0 0.0
    %949 = vmatpush.msra.mxu0 0.0
    %950 = vmatpush.msra.mxu0 0.0
    %951 = vmatpush.msra.mxu0 0.0
    %952 = vmatpush.msra.mxu0 0.0
    %953 = vmatpush.msra.mxu0 0.0
    %954 = vmatpush.msra.mxu0 0.0
    %955 = vmatpush.msra.mxu0 0.0
    %956 = vmatpush.msra.mxu0 0.0
    %957 = vmatpush.msra.mxu0 0.0
    %958 = vmatpush.msra.mxu0 0.0
    %959 = vmatpush.msra.mxu0 0.0
    %960 = vmatpush.msra.mxu0 0.0
    %961 = vmatpush.msra.mxu0 %v466
    %962 = vmatmul.f32.gmra.mxu0 %v944
    %v963 = vpop.f32.mrf.mxu0
    %v964 = vadd.f32 0.0, %v963
    %965 = vdwg.mxu0
    %968 = vrot.lane.b32.xlu0 %v849, 8
    %v969 = vpop.permute.xlu0 %968
    %970 = vrot.lane.b32.xlu0 %v872, 8
    %v971 = vpop.permute.xlu0 %970
    %976 = vrot.lane.b32.xlu0 %v895, 16
    %v977 = vpop.permute.xlu0 %976
    %978 = vrot.lane.b32.xlu0 %v918, 16
    %v979 = vpop.permute.xlu0 %978
    %984 = vrot.lane.b32.xlu0 %v941, 24
    %v985 = vpop.permute.xlu0 %984
    %986 = vrot.lane.b32.xlu0 %v964, 24
    %v987 = vpop.permute.xlu0 %986
    %v990 = vsel %vm469, %v803, %v969
    %v991 = vsel %vm469, %v826, %v971
    %vm992 = vcmask 130048
    %v993 = vsel %vm992, %v990, %v977
    %v994 = vsel %vm992, %v991, %v979
    %vm995 = vcmask 195584
    %v996 = vsel %vm995, %v993, %v985
    %v997 = vsel %vm995, %v994, %v987
    %v998 = vld [vmem:[#allocation7] sm:$0xff]
    %v999 = vld [vmem:[#allocation7 + $0x8] sm:$0xff]
    %v1000 = vld [vmem:[#allocation7 + $0x10] sm:$0xff]
    %v1001 = vld [vmem:[#allocation7 + $0x18] sm:$0xff]
    %v1002 = vld [vmem:[%s14] sm:$0x1]
    %v1004 = vperm.slane %v1002, 0
    %v1007 = vsel %vm236, %v996, 0
    %v1010 = vsel %vm236, %v997, 0
    %1012 = vmatpush.msra.mxu0 0.0
    %1013 = vmatpush.msra.mxu0 0.0
    %1014 = vmatpush.msra.mxu0 0.0
    %1015 = vmatpush.msra.mxu0 0.0
    %1016 = vmatpush.msra.mxu0 0.0
    %1017 = vmatpush.msra.mxu0 0.0
    %1018 = vmatpush.msra.mxu0 0.0
    %1019 = vmatpush.msra.mxu0 0.0
    %1020 = vmatpush.msra.mxu0 0.0
    %1021 = vmatpush.msra.mxu0 0.0
    %1022 = vmatpush.msra.mxu0 0.0
    %1023 = vmatpush.msra.mxu0 0.0
    %1024 = vmatpush.msra.mxu0 %v1001
    %1025 = vmatpush.msra.mxu0 %v1000
    %1026 = vmatpush.msra.mxu0 %v999
    %1027 = vmatpush.msra.mxu0 %v998
    %1028 = vmatmul.f32.gmra.mxu0 %v1007
    %v1029 = vpop.f32.mrf.mxu0
    %v1030 = vadd.f32 %v1004, %v1029
    %1031 = vmatmul.f32.gmra.mxu0 %v1010
    %v1032 = vpop.f32.mrf.mxu0
    %v1033 = vadd.f32 %v1004, %v1032
    %1034 = vdwg.mxu0
    %v1035 = vadd.f32 %v296, %v1030
    %v1036 = vadd.f32 %v297, %v1033
    %v1037 = vld [vmem:[#allocation8] sm:$0x1]
    %v1038 = vld [vmem:[%s16] sm:$0x1]
    %v1039 = vsel %vm236, %v1035, 0.0
    %1040 = vadd.xlane.f32.xlu0 %v1039
    %v1041 = vpop.xlane.xlu0 %1040
    %v1042 = vsel %vm236, %v1036, 0.0
    %1043 = vadd.xlane.f32.xlu0 %v1042
    %v1044 = vpop.xlane.xlu0 %1043
    %v1045 = vmul.f32 %v1041, %v249
    %v1046 = vmul.f32 %v1044, %v249
    %v1047 = vsub.f32 %v1035, %v1045
    %v1048 = vsub.f32 %v1036, %v1046
    %v1049 = vmul.f32 %v1047, %v1047
    %v1050 = vmul.f32 %v1048, %v1048
    %v1051 = vsel %vm236, %v1049, 0.0
    %1052 = vadd.xlane.f32.xlu0 %v1051
    %v1053 = vpop.xlane.xlu0 %1052
    %v1054 = vsel %vm236, %v1050, 0.0
    %1055 = vadd.xlane.f32.xlu0 %v1054
    %v1056 = vpop.xlane.xlu0 %1055
    %v1057 = vmul.f32 %v1053, %v249
    %v1058 = vmul.f32 %v1056, %v249
    %v1059 = vadd.f32 %v1057, 1e-12
    %v1060 = vadd.f32 %v1058, 1e-12
    %v1061 = vrsqrt.pop %v1059
    %v1062 = vmul.f32 %v1061, %v1059
    %v1063 = vmul.f32 %v1062, %v1061
    %v1064 = vmul.f32 0.5, %v1063
    %v1065 = vsub.f32 1.5, %v1064
    %v1066 = vmul.f32 %v1061, %v1065
    %vm1067 = vweird.f32 %v1059
    %vm1068 = vweird.f32 %v1061
    %vm1069 = vmor %vm1067, %vm1068
    %v1070 = vsel %vm1069, %v1061, %v1066
    %v1071 = vrsqrt.pop %v1060
    %v1072 = vmul.f32 %v1071, %v1060
    %v1073 = vmul.f32 %v1072, %v1071
    %v1074 = vmul.f32 0.5, %v1073
    %v1075 = vsub.f32 1.5, %v1074
    %v1076 = vmul.f32 %v1071, %v1075
    %vm1077 = vweird.f32 %v1060
    %vm1078 = vweird.f32 %v1071
    %vm1079 = vmor %vm1077, %vm1078
    %v1080 = vsel %vm1079, %v1071, %v1076
    %v1081 = vmul.f32 %v1047, %v1070
    %v1082 = vmul.f32 %v1048, %v1080
    %v1084 = vperm.slane %v1037, 0
    %v1086 = vmul.f32 %v1081, %v1084
    %v1087 = vmul.f32 %v1082, %v1084
    %v1089 = vperm.slane %v1038, 0
    %v1091 = vadd.f32 %v1086, %v1089
    %v1092 = vadd.f32 %v1087, %v1089
    %v1093 = vld [vmem:[#allocation10] sm:$0xff]
    %v1094 = vld [vmem:[#allocation10 + $0x8] sm:$0xff]
    %v1095 = vld [vmem:[#allocation10 + $0x10] sm:$0xff]
    %v1096 = vld [vmem:[#allocation10 + $0x18] sm:$0xff]
    %v1097 = vld [vmem:[%s18] sm:$0x1]
    %v1099 = vperm.slane %v1097, 0
    %v1102 = vsel %vm236, %v1091, 0
    %v1105 = vsel %vm236, %v1092, 0
    %1107 = vmatpush.msra.mxu0 0.0
    %1108 = vmatpush.msra.mxu0 0.0
    %1109 = vmatpush.msra.mxu0 0.0
    %1110 = vmatpush.msra.mxu0 0.0
    %1111 = vmatpush.msra.mxu0 0.0
    %1112 = vmatpush.msra.mxu0 0.0
    %1113 = vmatpush.msra.mxu0 0.0
    %1114 = vmatpush.msra.mxu0 0.0
    %1115 = vmatpush.msra.mxu0 0.0
    %1116 = vmatpush.msra.mxu0 0.0
    %1117 = vmatpush.msra.mxu0 0.0
    %1118 = vmatpush.msra.mxu0 0.0
    %1119 = vmatpush.msra.mxu0 %v1096
    %1120 = vmatpush.msra.mxu0 %v1095
    %1121 = vmatpush.msra.mxu0 %v1094
    %1122 = vmatpush.msra.mxu0 %v1093
    %1123 = vmatmul.f32.gmra.mxu0 %v1102
    %v1124 = vpop.f32.mrf.mxu0
    %v1125 = vadd.f32 %v1099, %v1124
    %1126 = vmatmul.f32.gmra.mxu0 %v1105
    %v1127 = vpop.f32.mrf.mxu0
    %v1128 = vadd.f32 %v1099, %v1127
    %1129 = vdwg.mxu0
    %v1130 = vmul.f32 %v1125, %v1125
    %v1131 = vmul.f32 %v1128, %v1128
    %v1132 = vmul.f32 %v1125, %v1130
    %v1133 = vmul.f32 %v1128, %v1131
    %v1134 = vmul.f32 %v1132, 0.044715
    %v1135 = vmul.f32 %v1133, 0.044715
    %v1136 = vadd.f32 %v1125, %v1134
    %v1137 = vadd.f32 %v1128, %v1135
    %v1138 = vmul.f32 %v1136, 0.7978846
    %v1139 = vmul.f32 %v1137, 0.7978846
    %v1140 = vtanh.pop %v1138
    %v1141 = vtanh.pop %v1139
    %v1142 = vadd.f32 %v1140, 1.0
    %v1143 = vadd.f32 %v1141, 1.0
    %v1144 = vmul.f32 %v1142, 0.5
    %v1145 = vmul.f32 %v1143, 0.5
    %v1146 = vmul.f32 %v1125, %v1144
    %v1147 = vmul.f32 %v1128, %v1145
    %v1148 = vld [vmem:[%s19] sm:$0xff]
    %v1149 = vld [vmem:[%s19 + $0x8] sm:$0xff]
    %v1150 = vld [vmem:[%s19 + $0x10] sm:$0xff]
    %v1151 = vld [vmem:[%s19 + $0x18] sm:$0xff]
    %v1152 = vld [vmem:[%s19 + $0x20] sm:$0xff]
    %v1153 = vld [vmem:[%s19 + $0x28] sm:$0xff]
    %v1154 = vld [vmem:[%s19 + $0x30] sm:$0xff]
    %v1155 = vld [vmem:[%s19 + $0x38] sm:$0xff]
    %v1156 = vld [vmem:[%s20] sm:$0x1]
    %v1158 = vperm.slane %v1156, 0
    %v1161 = vsel %vm201, %v1146, 0
    %v1164 = vsel %vm201, %v1147, 0
    %1166 = vmatpush.msra.mxu0 0.0
    %1167 = vmatpush.msra.mxu0 0.0
    %1168 = vmatpush.msra.mxu0 0.0
    %1169 = vmatpush.msra.mxu0 0.0
    %1170 = vmatpush.msra.mxu0 0.0
    %1171 = vmatpush.msra.mxu0 0.0
    %1172 = vmatpush.msra.mxu0 0.0
    %1173 = vmatpush.msra.mxu0 0.0
    %1174 = vmatpush.msra.mxu0 %v1155
    %1175 = vmatpush.msra.mxu0 %v1154
    %1176 = vmatpush.msra.mxu0 %v1153
    %1177 = vmatpush.msra.mxu0 %v1152
    %1178 = vmatpush.msra.mxu0 %v1151
    %1179 = vmatpush.msra.mxu0 %v1150
    %1180 = vmatpush.msra.mxu0 %v1149
    %1181 = vmatpush.msra.mxu0 %v1148
    %1182 = vmatmul.f32.gmra.mxu0 %v1161
    %v1183 = vpop.f32.mrf.mxu0
    %v1184 = vadd.f32 %v1158, %v1183
    %1185 = vmatmul.f32.gmra.mxu0 %v1164
    %v1186 = vpop.f32.mrf.mxu0
    %v1187 = vadd.f32 %v1158, %v1186
    %1188 = vdwg.mxu0
    %v1189 = vadd.f32 %v1091, %v1184
    %v1190 = vadd.f32 %v1092, %v1187
    %v1191 = vld [vmem:[%s21] sm:$0x1]
    %v1192 = vld [vmem:[#allocation11] sm:$0x1]
    %v1193 = vsel %vm236, %v1189, 0.0
    %1194 = vadd.xlane.f32.xlu0 %v1193
    %v1195 = vpop.xlane.xlu0 %1194
    %v1196 = vsel %vm236, %v1190, 0.0
    %1197 = vadd.xlane.f32.xlu0 %v1196
    %v1198 = vpop.xlane.xlu0 %1197
    %v1199 = vmul.f32 %v1195, %v249
    %v1200 = vmul.f32 %v1198, %v249
    %v1201 = vsub.f32 %v1189, %v1199
    %v1202 = vsub.f32 %v1190, %v1200
    %v1203 = vmul.f32 %v1201, %v1201
    %v1204 = vmul.f32 %v1202, %v1202
    %v1205 = vsel %vm236, %v1203, 0.0
    %1206 = vadd.xlane.f32.xlu0 %v1205
    %v1207 = vpop.xlane.xlu0 %1206
    %v1208 = vsel %vm236, %v1204, 0.0
    %1209 = vadd.xlane.f32.xlu0 %v1208
    %v1210 = vpop.xlane.xlu0 %1209
    %v1211 = vmul.f32 %v1207, %v249
    %v1212 = vmul.f32 %v1210, %v249
    %v1213 = vadd.f32 %v1211, 1e-12
    %v1214 = vadd.f32 %v1212, 1e-12
    %v1215 = vrsqrt.pop %v1213
    %v1216 = vmul.f32 %v1215, %v1213
    %v1217 = vmul.f32 %v1216, %v1215
    %v1218 = vmul.f32 0.5, %v1217
    %v1219 = vsub.f32 1.5, %v1218
    %v1220 = vmul.f32 %v1215, %v1219
    %vm1221 = vweird.f32 %v1213
    %vm1222 = vweird.f32 %v1215
    %vm1223 = vmor %vm1221, %vm1222
    %v1224 = vsel %vm1223, %v1215, %v1220
    %v1225 = vrsqrt.pop %v1214
    %v1226 = vmul.f32 %v1225, %v1214
    %v1227 = vmul.f32 %v1226, %v1225
    %v1228 = vmul.f32 0.5, %v1227
    %v1229 = vsub.f32 1.5, %v1228
    %v1230 = vmul.f32 %v1225, %v1229
    %vm1231 = vweird.f32 %v1214
    %vm1232 = vweird.f32 %v1225
    %vm1233 = vmor %vm1231, %vm1232
    %v1234 = vsel %vm1233, %v1225, %v1230
    %v1235 = vmul.f32 %v1201, %v1224
    %v1236 = vmul.f32 %v1202, %v1234
    %v1238 = vperm.slane %v1191, 0
    %v1240 = vmul.f32 %v1235, %v1238
    %v1241 = vmul.f32 %v1236, %v1238
    %v1243 = vperm.slane %v1192, 0
    %v1245 = vadd.f32 %v1240, %v1243
    %v1246 = vadd.f32 %v1241, %v1243
    %s1247 = scalar_lea.vmem %s7, 32
    %v1248 = vld [vmem:[%s1247] sm:$0xff]
    %v1249 = vld [vmem:[%s1247 + $0x8] sm:$0xff]
    %v1250 = vld [vmem:[%s1247 + $0x10] sm:$0xff]
    %v1251 = vld [vmem:[%s1247 + $0x18] sm:$0xff]
    %s1252 = scalar_lea.vmem %s8, 1
    %v1253 = vld [vmem:[%s1252] sm:$0x1]
    %v1255 = vperm.slane %v1253, 0
    %v1258 = vsel %vm236, %v1245, 0
    %v1261 = vsel %vm236, %v1246, 0
    %1263 = vmatpush.msra.mxu0 0.0
    %1264 = vmatpush.msra.mxu0 0.0
    %1265 = vmatpush.msra.mxu0 0.0
    %1266 = vmatpush.msra.mxu0 0.0
    %1267 = vmatpush.msra.mxu0 0.0
    %1268 = vmatpush.msra.mxu0 0.0
    %1269 = vmatpush.msra.mxu0 0.0
    %1270 = vmatpush.msra.mxu0 0.0
    %1271 = vmatpush.msra.mxu0 0.0
    %1272 = vmatpush.msra.mxu0 0.0
    %1273 = vmatpush.msra.mxu0 0.0
    %1274 = vmatpush.msra.mxu0 0.0
    %1275 = vmatpush.msra.mxu0 %v1251
    %1276 = vmatpush.msra.mxu0 %v1250
    %1277 = vmatpush.msra.mxu0 %v1249
    %1278 = vmatpush.msra.mxu0 %v1248
    %1279 = vmatmul.f32.gmra.mxu0 %v1258
    %v1280 = vpop.f32.mrf.mxu0
    %v1281 = vadd.f32 %v1255, %v1280
    %1282 = vmatmul.f32.gmra.mxu0 %v1261
    %v1283 = vpop.f32.mrf.mxu0
    %v1284 = vadd.f32 %v1255, %v1283
    %1285 = vdwg.mxu0
    %s1286 = scalar_lea.vmem %s9, 32
    %v1287 = vld [vmem:[%s1286] sm:$0xff]
    %v1288 = vld [vmem:[%s1286 + $0x8] sm:$0xff]
    %v1289 = vld [vmem:[%s1286 + $0x10] sm:$0xff]
    %v1290 = vld [vmem:[%s1286 + $0x18] sm:$0xff]
    %s1291 = scalar_lea.vmem %s10, 1
    %v1292 = vld [vmem:[%s1291] sm:$0x1]
    %v1294 = vperm.slane %v1292, 0
    %1296 = vmatpush.msra.mxu0 0.0
    %1297 = vmatpush.msra.mxu0 0.0
    %1298 = vmatpush.msra.mxu0 0.0
    %1299 = vmatpush.msra.mxu0 0.0
    %1300 = vmatpush.msra.mxu0 0.0
    %1301 = vmatpush.msra.mxu0 0.0
    %1302 = vmatpush.msra.mxu0 0.0
    %1303 = vmatpush.msra.mxu0 0.0
    %1304 = vmatpush.msra.mxu0 0.0
    %1305 = vmatpush.msra.mxu0 0.0
    %1306 = vmatpush.msra.mxu0 0.0
    %1307 = vmatpush.msra.mxu0 0.0
    %1308 = vmatpush.msra.mxu0 %v1290
    %1309 = vmatpush.msra.mxu0 %v1289
    %1310 = vmatpush.msra.mxu0 %v1288
    %1311 = vmatpush.msra.mxu0 %v1287
    %1312 = vmatmul.f32.gmra.mxu0 %v1258
    %v1313 = vpop.f32.mrf.mxu0
    %v1314 = vadd.f32 %v1294, %v1313
    %1315 = vmatmul.f32.gmra.mxu0 %v1261
    %v1316 = vpop.f32.mrf.mxu0
    %v1317 = vadd.f32 %v1294, %v1316
    %1318 = vdwg.mxu0
    %s1319 = scalar_lea.vmem %s11, 32
    %v1320 = vld [vmem:[%s1319] sm:$0xff]
    %v1321 = vld [vmem:[%s1319 + $0x8] sm:$0xff]
    %v1322 = vld [vmem:[%s1319 + $0x10] sm:$0xff]
    %v1323 = vld [vmem:[%s1319 + $0x18] sm:$0xff]
    %s1324 = scalar_lea.vmem %s12, 1
    %v1325 = vld [vmem:[%s1324] sm:$0x1]
    %v1327 = vperm.slane %v1325, 0
    %1329 = vmatpush.msra.mxu0 0.0
    %1330 = vmatpush.msra.mxu0 0.0
    %1331 = vmatpush.msra.mxu0 0.0
    %1332 = vmatpush.msra.mxu0 0.0
    %1333 = vmatpush.msra.mxu0 0.0
    %1334 = vmatpush.msra.mxu0 0.0
    %1335 = vmatpush.msra.mxu0 0.0
    %1336 = vmatpush.msra.mxu0 0.0
    %1337 = vmatpush.msra.mxu0 0.0
    %1338 = vmatpush.msra.mxu0 0.0
    %1339 = vmatpush.msra.mxu0 0.0
    %1340 = vmatpush.msra.mxu0 0.0
    %1341 = vmatpush.msra.mxu0 %v1323
    %1342 = vmatpush.msra.mxu0 %v1322
    %1343 = vmatpush.msra.mxu0 %v1321
    %1344 = vmatpush.msra.mxu0 %v1320
    %1345 = vmatmul.f32.gmra.mxu0 %v1258
    %v1346 = vpop.f32.mrf.mxu0
    %v1347 = vadd.f32 %v1327, %v1346
    %1348 = vmatmul.f32.gmra.mxu0 %v1261
    %v1349 = vpop.f32.mrf.mxu0
    %v1350 = vadd.f32 %v1327, %v1349
    %1351 = vdwg.mxu0
    %1354 = vrot.lane.b32.xlu0 %v1281, 120
    %v1355 = vpop.permute.xlu0 %1354
    %1356 = vrot.lane.b32.xlu0 %v1284, 120
    %v1357 = vpop.permute.xlu0 %1356
    %1358 = vrot.lane.b32.xlu0 %v1281, 112
    %v1359 = vpop.permute.xlu0 %1358
    %1360 = vrot.lane.b32.xlu0 %v1284, 112
    %v1361 = vpop.permute.xlu0 %1360
    %1362 = vrot.lane.b32.xlu0 %v1281, 104
    %v1363 = vpop.permute.xlu0 %1362
    %1364 = vrot.lane.b32.xlu0 %v1284, 104
    %v1365 = vpop.permute.xlu0 %1364
    %1368 = vrot.lane.b32.xlu0 %v1314, 120
    %v1369 = vpop.permute.xlu0 %1368
    %1370 = vrot.lane.b32.xlu0 %v1317, 120
    %v1371 = vpop.permute.xlu0 %1370
    %1372 = vrot.lane.b32.xlu0 %v1314, 112
    %v1373 = vpop.permute.xlu0 %1372
    %1374 = vrot.lane.b32.xlu0 %v1317, 112
    %v1375 = vpop.permute.xlu0 %1374
    %1376 = vrot.lane.b32.xlu0 %v1314, 104
    %v1377 = vpop.permute.xlu0 %1376
    %1378 = vrot.lane.b32.xlu0 %v1317, 104
    %v1379 = vpop.permute.xlu0 %1378
    %1382 = vrot.lane.b32.xlu0 %v1347, 120
    %v1383 = vpop.permute.xlu0 %1382
    %1384 = vrot.lane.b32.xlu0 %v1350, 120
    %v1385 = vpop.permute.xlu0 %1384
    %1388 = vrot.lane.b32.xlu0 %v1347, 112
    %v1389 = vpop.permute.xlu0 %1388
    %1390 = vrot.lane.b32.xlu0 %v1350, 112
    %v1391 = vpop.permute.xlu0 %1390
    %1394 = vrot.lane.b32.xlu0 %v1347, 104
    %v1395 = vpop.permute.xlu0 %1394
    %1396 = vrot.lane.b32.xlu0 %v1350, 104
    %v1397 = vpop.permute.xlu0 %1396
    %v1400 = vsel %vm469, %v1281, 0
    %v1402 = vsel %vm469, %v1314, 0
    %1404 = vmatpush.xpose.msra.mxu0 0.0
    %1405 = vmatpush.xpose.msra.mxu0 0.0
    %1406 = vmatpush.xpose.msra.mxu0 0.0
    %1407 = vmatpush.xpose.msra.mxu0 0.0
    %1408 = vmatpush.xpose.msra.mxu0 0.0
    %1409 = vmatpush.xpose.msra.mxu0 0.0
    %1410 = vmatpush.xpose.msra.mxu0 0.0
    %1411 = vmatpush.xpose.msra.mxu0 0.0
    %1412 = vmatpush.xpose.msra.mxu0 0.0
    %1413 = vmatpush.xpose.msra.mxu0 0.0
    %1414 = vmatpush.xpose.msra.mxu0 0.0
    %1415 = vmatpush.xpose.msra.mxu0 0.0
    %1416 = vmatpush.xpose.msra.mxu0 0.0
    %1417 = vmatpush.xpose.msra.mxu0 0.0
    %1418 = vmatpush.xpose.msra.mxu0 0.0
    %1419 = vmatpush.xpose.msra.mxu0 %v1402
    %1420 = vmatmul.f32.gmra.mxu0 %v1400
    %v1421 = vpop.f32.mrf.mxu0
    %v1422 = vadd.f32 0.0, %v1421
    %1423 = vdwg.mxu0
    %v1424 = vsel %vm469, %v1284, 0
    %v1426 = vsel %vm469, %v1317, 0
    %1428 = vmatpush.xpose.msra.mxu0 0.0
    %1429 = vmatpush.xpose.msra.mxu0 0.0
    %1430 = vmatpush.xpose.msra.mxu0 0.0
    %1431 = vmatpush.xpose.msra.mxu0 0.0
    %1432 = vmatpush.xpose.msra.mxu0 0.0
    %1433 = vmatpush.xpose.msra.mxu0 0.0
    %1434 = vmatpush.xpose.msra.mxu0 0.0
    %1435 = vmatpush.xpose.msra.mxu0 0.0
    %1436 = vmatpush.xpose.msra.mxu0 0.0
    %1437 = vmatpush.xpose.msra.mxu0 0.0
    %1438 = vmatpush.xpose.msra.mxu0 0.0
    %1439 = vmatpush.xpose.msra.mxu0 0.0
    %1440 = vmatpush.xpose.msra.mxu0 0.0
    %1441 = vmatpush.xpose.msra.mxu0 0.0
    %1442 = vmatpush.xpose.msra.mxu0 0.0
    %1443 = vmatpush.xpose.msra.mxu0 %v1426
    %1444 = vmatmul.f32.gmra.mxu0 %v1424
    %v1445 = vpop.f32.mrf.mxu0
    %v1446 = vadd.f32 0.0, %v1445
    %1447 = vdwg.mxu0
    %v1448 = vsel %vm469, %v1355, 0
    %v1450 = vsel %vm469, %v1369, 0
    %1452 = vmatpush.xpose.msra.mxu0 0.0
    %1453 = vmatpush.xpose.msra.mxu0 0.0
    %1454 = vmatpush.xpose.msra.mxu0 0.0
    %1455 = vmatpush.xpose.msra.mxu0 0.0
    %1456 = vmatpush.xpose.msra.mxu0 0.0
    %1457 = vmatpush.xpose.msra.mxu0 0.0
    %1458 = vmatpush.xpose.msra.mxu0 0.0
    %1459 = vmatpush.xpose.msra.mxu0 0.0
    %1460 = vmatpush.xpose.msra.mxu0 0.0
    %1461 = vmatpush.xpose.msra.mxu0 0.0
    %1462 = vmatpush.xpose.msra.mxu0 0.0
    %1463 = vmatpush.xpose.msra.mxu0 0.0
    %1464 = vmatpush.xpose.msra.mxu0 0.0
    %1465 = vmatpush.xpose.msra.mxu0 0.0
    %1466 = vmatpush.xpose.msra.mxu0 0.0
    %1467 = vmatpush.xpose.msra.mxu0 %v1450
    %1468 = vmatmul.f32.gmra.mxu0 %v1448
    %v1469 = vpop.f32.mrf.mxu0
    %v1470 = vadd.f32 0.0, %v1469
    %1471 = vdwg.mxu0
    %v1472 = vsel %vm469, %v1357, 0
    %v1474 = vsel %vm469, %v1371, 0
    %1476 = vmatpush.xpose.msra.mxu0 0.0
    %1477 = vmatpush.xpose.msra.mxu0 0.0
    %1478 = vmatpush.xpose.msra.mxu0 0.0
    %1479 = vmatpush.xpose.msra.mxu0 0.0
    %1480 = vmatpush.xpose.msra.mxu0 0.0
    %1481 = vmatpush.xpose.msra.mxu0 0.0
    %1482 = vmatpush.xpose.msra.mxu0 0.0
    %1483 = vmatpush.xpose.msra.mxu0 0.0
    %1484 = vmatpush.xpose.msra.mxu0 0.0
    %1485 = vmatpush.xpose.msra.mxu0 0.0
    %1486 = vmatpush.xpose.msra.mxu0 0.0
    %1487 = vmatpush.xpose.msra.mxu0 0.0
    %1488 = vmatpush.xpose.msra.mxu0 0.0
    %1489 = vmatpush.xpose.msra.mxu0 0.0
    %1490 = vmatpush.xpose.msra.mxu0 0.0
    %1491 = vmatpush.xpose.msra.mxu0 %v1474
    %1492 = vmatmul.f32.gmra.mxu0 %v1472
    %v1493 = vpop.f32.mrf.mxu0
    %v1494 = vadd.f32 0.0, %v1493
    %1495 = vdwg.mxu0
    %v1496 = vsel %vm469, %v1359, 0
    %v1498 = vsel %vm469, %v1373, 0
    %1500 = vmatpush.xpose.msra.mxu0 0.0
    %1501 = vmatpush.xpose.msra.mxu0 0.0
    %1502 = vmatpush.xpose.msra.mxu0 0.0
    %1503 = vmatpush.xpose.msra.mxu0 0.0
    %1504 = vmatpush.xpose.msra.mxu0 0.0
    %1505 = vmatpush.xpose.msra.mxu0 0.0
    %1506 = vmatpush.xpose.msra.mxu0 0.0
    %1507 = vmatpush.xpose.msra.mxu0 0.0
    %1508 = vmatpush.xpose.msra.mxu0 0.0
    %1509 = vmatpush.xpose.msra.mxu0 0.0
    %1510 = vmatpush.xpose.msra.mxu0 0.0
    %1511 = vmatpush.xpose.msra.mxu0 0.0
    %1512 = vmatpush.xpose.msra.mxu0 0.0
    %1513 = vmatpush.xpose.msra.mxu0 0.0
    %1514 = vmatpush.xpose.msra.mxu0 0.0
    %1515 = vmatpush.xpose.msra.mxu0 %v1498
    %1516 = vmatmul.f32.gmra.mxu0 %v1496
    %v1517 = vpop.f32.mrf.mxu0
    %v1518 = vadd.f32 0.0, %v1517
    %1519 = vdwg.mxu0
    %v1520 = vsel %vm469, %v1361, 0
    %v1522 = vsel %vm469, %v1375, 0
    %1524 = vmatpush.xpose.msra.mxu0 0.0
    %1525 = vmatpush.xpose.msra.mxu0 0.0
    %1526 = vmatpush.xpose.msra.mxu0 0.0
    %1527 = vmatpush.xpose.msra.mxu0 0.0
    %1528 = vmatpush.xpose.msra.mxu0 0.0
    %1529 = vmatpush.xpose.msra.mxu0 0.0
    %1530 = vmatpush.xpose.msra.mxu0 0.0
    %1531 = vmatpush.xpose.msra.mxu0 0.0
    %1532 = vmatpush.xpose.msra.mxu0 0.0
    %1533 = vmatpush.xpose.msra.mxu0 0.0
    %1534 = vmatpush.xpose.msra.mxu0 0.0
    %1535 = vmatpush.xpose.msra.mxu0 0.0
    %1536 = vmatpush.xpose.msra.mxu0 0.0
    %1537 = vmatpush.xpose.msra.mxu0 0.0
    %1538 = vmatpush.xpose.msra.mxu0 0.0
    %1539 = vmatpush.xpose.msra.mxu0 %v1522
    %1540 = vmatmul.f32.gmra.mxu0 %v1520
    %v1541 = vpop.f32.mrf.mxu0
    %v1542 = vadd.f32 0.0, %v1541
    %1543 = vdwg.mxu0
    %v1544 = vsel %vm469, %v1363, 0
    %v1546 = vsel %vm469, %v1377, 0
    %1548 = vmatpush.xpose.msra.mxu0 0.0
    %1549 = vmatpush.xpose.msra.mxu0 0.0
    %1550 = vmatpush.xpose.msra.mxu0 0.0
    %1551 = vmatpush.xpose.msra.mxu0 0.0
    %1552 = vmatpush.xpose.msra.mxu0 0.0
    %1553 = vmatpush.xpose.msra.mxu0 0.0
    %1554 = vmatpush.xpose.msra.mxu0 0.0
    %1555 = vmatpush.xpose.msra.mxu0 0.0
    %1556 = vmatpush.xpose.msra.mxu0 0.0
    %1557 = vmatpush.xpose.msra.mxu0 0.0
    %1558 = vmatpush.xpose.msra.mxu0 0.0
    %1559 = vmatpush.xpose.msra.mxu0 0.0
    %1560 = vmatpush.xpose.msra.mxu0 0.0
    %1561 = vmatpush.xpose.msra.mxu0 0.0
    %1562 = vmatpush.xpose.msra.mxu0 0.0
    %1563 = vmatpush.xpose.msra.mxu0 %v1546
    %1564 = vmatmul.f32.gmra.mxu0 %v1544
    %v1565 = vpop.f32.mrf.mxu0
    %v1566 = vadd.f32 0.0, %v1565
    %1567 = vdwg.mxu0
    %v1568 = vsel %vm469, %v1365, 0
    %v1570 = vsel %vm469, %v1379, 0
    %1572 = vmatpush.xpose.msra.mxu0 0.0
    %1573 = vmatpush.xpose.msra.mxu0 0.0
    %1574 = vmatpush.xpose.msra.mxu0 0.0
    %1575 = vmatpush.xpose.msra.mxu0 0.0
    %1576 = vmatpush.xpose.msra.mxu0 0.0
    %1577 = vmatpush.xpose.msra.mxu0 0.0
    %1578 = vmatpush.xpose.msra.mxu0 0.0
    %1579 = vmatpush.xpose.msra.mxu0 0.0
    %1580 = vmatpush.xpose.msra.mxu0 0.0
    %1581 = vmatpush.xpose.msra.mxu0 0.0
    %1582 = vmatpush.xpose.msra.mxu0 0.0
    %1583 = vmatpush.xpose.msra.mxu0 0.0
    %1584 = vmatpush.xpose.msra.mxu0 0.0
    %1585 = vmatpush.xpose.msra.mxu0 0.0
    %1586 = vmatpush.xpose.msra.mxu0 0.0
    %1587 = vmatpush.xpose.msra.mxu0 %v1570
    %1588 = vmatmul.f32.gmra.mxu0 %v1568
    %v1589 = vpop.f32.mrf.mxu0
    %v1590 = vadd.f32 0.0, %v1589
    %1591 = vdwg.mxu0
    %v1592 = vmul.f32 %v1422, 0.35355338
    %v1593 = vmul.f32 %v1446, 0.35355338
    %v1594 = vmul.f32 %v1470, 0.35355338
    %v1595 = vmul.f32 %v1494, 0.35355338
    %v1596 = vmul.f32 %v1518, 0.35355338
    %v1597 = vmul.f32 %v1542, 0.35355338
    %v1598 = vmul.f32 %v1566, 0.35355338
    %v1599 = vmul.f32 %v1590, 0.35355338
    %v1600 = vadd.f32 %v1592, %v670
    %v1601 = vadd.f32 %v1593, %v671
    %v1602 = vadd.f32 %v1594, %v672
    %v1603 = vadd.f32 %v1595, %v673
    %v1604 = vadd.f32 %v1596, %v674
    %v1605 = vadd.f32 %v1597, %v675
    %v1606 = vadd.f32 %v1598, %v676
    %v1607 = vadd.f32 %v1599, %v677
    %v1608 = vsel %vm469, %v1600, -inf
    %1609 = vmax.xlane.f32.xlu0 %v1608
    %v1610 = vpop.xlane.xlu0 %1609
    %v1611 = vsel %vm469, %v1601, -inf
    %1612 = vmax.xlane.f32.xlu0 %v1611
    %v1613 = vpop.xlane.xlu0 %1612
    %v1614 = vsel %vm469, %v1602, -inf
    %1615 = vmax.xlane.f32.xlu0 %v1614
    %v1616 = vpop.xlane.xlu0 %1615
    %v1617 = vsel %vm469, %v1603, -inf
    %1618 = vmax.xlane.f32.xlu0 %v1617
    %v1619 = vpop.xlane.xlu0 %1618
    %v1620 = vsel %vm469, %v1604, -inf
    %1621 = vmax.xlane.f32.xlu0 %v1620
    %v1622 = vpop.xlane.xlu0 %1621
    %v1623 = vsel %vm469, %v1605, -inf
    %1624 = vmax.xlane.f32.xlu0 %v1623
    %v1625 = vpop.xlane.xlu0 %1624
    %v1626 = vsel %vm469, %v1606, -inf
    %1627 = vmax.xlane.f32.xlu0 %v1626
    %v1628 = vpop.xlane.xlu0 %1627
    %v1629 = vsel %vm469, %v1607, -inf
    %1630 = vmax.xlane.f32.xlu0 %v1629
    %v1631 = vpop.xlane.xlu0 %1630
    %v1632 = vsub.f32 %v1600, %v1610
    %v1633 = vsub.f32 %v1601, %v1613
    %v1634 = vsub.f32 %v1602, %v1616
    %v1635 = vsub.f32 %v1603, %v1619
    %v1636 = vsub.f32 %v1604, %v1622
    %v1637 = vsub.f32 %v1605, %v1625
    %v1638 = vsub.f32 %v1606, %v1628
    %v1639 = vsub.f32 %v1607, %v1631
    %v1640 = vmul.f32 %v1632, 1.442695
    %v1641 = vpow.pop %v1640
    %v1642 = vmul.f32 %v1633, 1.442695
    %v1643 = vpow.pop %v1642
    %v1644 = vmul.f32 %v1634, 1.442695
    %v1645 = vpow.pop %v1644
    %v1646 = vmul.f32 %v1635, 1.442695
    %v1647 = vpow.pop %v1646
    %v1648 = vmul.f32 %v1636, 1.442695
    %v1649 = vpow.pop %v1648
    %v1650 = vmul.f32 %v1637, 1.442695
    %v1651 = vpow.pop %v1650
    %v1652 = vmul.f32 %v1638, 1.442695
    %v1653 = vpow.pop %v1652
    %v1654 = vmul.f32 %v1639, 1.442695
    %v1655 = vpow.pop %v1654
    %v1656 = vsel %vm469, %v1641, 0.0
    %1657 = vadd.xlane.f32.xlu0 %v1656
    %v1658 = vpop.xlane.xlu0 %1657
    %v1659 = vsel %vm469, %v1643, 0.0
    %1660 = vadd.xlane.f32.xlu0 %v1659
    %v1661 = vpop.xlane.xlu0 %1660
    %v1662 = vsel %vm469, %v1645, 0.0
    %1663 = vadd.xlane.f32.xlu0 %v1662
    %v1664 = vpop.xlane.xlu0 %1663
    %v1665 = vsel %vm469, %v1647, 0.0
    %1666 = vadd.xlane.f32.xlu0 %v1665
    %v1667 = vpop.xlane.xlu0 %1666
    %v1668 = vsel %vm469, %v1649, 0.0
    %1669 = vadd.xlane.f32.xlu0 %v1668
    %v1670 = vpop.xlane.xlu0 %1669
    %v1671 = vsel %vm469, %v1651, 0.0
    %1672 = vadd.xlane.f32.xlu0 %v1671
    %v1673 = vpop.xlane.xlu0 %1672
    %v1674 = vsel %vm469, %v1653, 0.0
    %1675 = vadd.xlane.f32.xlu0 %v1674
    %v1676 = vpop.xlane.xlu0 %1675
    %v1677 = vsel %vm469, %v1655, 0.0
    %1678 = vadd.xlane.f32.xlu0 %v1677
    %v1679 = vpop.xlane.xlu0 %1678
    %v1680 = vrcp.pop %v1658
    %v1681 = vrcp.pop %v1661
    %v1682 = vrcp.pop %v1664
    %v1683 = vrcp.pop %v1667
    %v1684 = vrcp.pop %v1670
    %v1685 = vrcp.pop %v1673
    %v1686 = vrcp.pop %v1676
    %v1687 = vrcp.pop %v1679
    %v1688 = vmul.f32 %v1641, %v1680
    %v1689 = vmul.f32 %v1643, %v1681
    %v1690 = vmul.f32 %v1645, %v1682
    %v1691 = vmul.f32 %v1647, %v1683
    %v1692 = vmul.f32 %v1649, %v1684
    %v1693 = vmul.f32 %v1651, %v1685
    %v1694 = vmul.f32 %v1653, %v1686
    %v1695 = vmul.f32 %v1655, %v1687
    %v1697 = vsel %vm469, %v1688, 0
    %1699 = vmatpush.msra.mxu0 0.0
    %1700 = vmatpush.msra.mxu0 0.0
    %1701 = vmatpush.msra.mxu0 0.0
    %1702 = vmatpush.msra.mxu0 0.0
    %1703 = vmatpush.msra.mxu0 0.0
    %1704 = vmatpush.msra.mxu0 0.0
    %1705 = vmatpush.msra.mxu0 0.0
    %1706 = vmatpush.msra.mxu0 0.0
    %1707 = vmatpush.msra.mxu0 0.0
    %1708 = vmatpush.msra.mxu0 0.0
    %1709 = vmatpush.msra.mxu0 0.0
    %1710 = vmatpush.msra.mxu0 0.0
    %1711 = vmatpush.msra.mxu0 0.0
    %1712 = vmatpush.msra.mxu0 0.0
    %1713 = vmatpush.msra.mxu0 0.0
    %1714 = vmatpush.msra.mxu0 %v1347
    %1715 = vmatmul.f32.gmra.mxu0 %v1697
    %v1716 = vpop.f32.mrf.mxu0
    %v1717 = vadd.f32 0.0, %v1716
    %1718 = vdwg.mxu0
    %v1720 = vsel %vm469, %v1689, 0
    %1722 = vmatpush.msra.mxu0 0.0
    %1723 = vmatpush.msra.mxu0 0.0
    %1724 = vmatpush.msra.mxu0 0.0
    %1725 = vmatpush.msra.mxu0 0.0
    %1726 = vmatpush.msra.mxu0 0.0
    %1727 = vmatpush.msra.mxu0 0.0
    %1728 = vmatpush.msra.mxu0 0.0
    %1729 = vmatpush.msra.mxu0 0.0
    %1730 = vmatpush.msra.mxu0 0.0
    %1731 = vmatpush.msra.mxu0 0.0
    %1732 = vmatpush.msra.mxu0 0.0
    %1733 = vmatpush.msra.mxu0 0.0
    %1734 = vmatpush.msra.mxu0 0.0
    %1735 = vmatpush.msra.mxu0 0.0
    %1736 = vmatpush.msra.mxu0 0.0
    %1737 = vmatpush.msra.mxu0 %v1350
    %1738 = vmatmul.f32.gmra.mxu0 %v1720
    %v1739 = vpop.f32.mrf.mxu0
    %v1740 = vadd.f32 0.0, %v1739
    %1741 = vdwg.mxu0
    %v1743 = vsel %vm469, %v1690, 0
    %1745 = vmatpush.msra.mxu0 0.0
    %1746 = vmatpush.msra.mxu0 0.0
    %1747 = vmatpush.msra.mxu0 0.0
    %1748 = vmatpush.msra.mxu0 0.0
    %1749 = vmatpush.msra.mxu0 0.0
    %1750 = vmatpush.msra.mxu0 0.0
    %1751 = vmatpush.msra.mxu0 0.0
    %1752 = vmatpush.msra.mxu0 0.0
    %1753 = vmatpush.msra.mxu0 0.0
    %1754 = vmatpush.msra.mxu0 0.0
    %1755 = vmatpush.msra.mxu0 0.0
    %1756 = vmatpush.msra.mxu0 0.0
    %1757 = vmatpush.msra.mxu0 0.0
    %1758 = vmatpush.msra.mxu0 0.0
    %1759 = vmatpush.msra.mxu0 0.0
    %1760 = vmatpush.msra.mxu0 %v1383
    %1761 = vmatmul.f32.gmra.mxu0 %v1743
    %v1762 = vpop.f32.mrf.mxu0
    %v1763 = vadd.f32 0.0, %v1762
    %1764 = vdwg.mxu0
    %v1766 = vsel %vm469, %v1691, 0
    %1768 = vmatpush.msra.mxu0 0.0
    %1769 = vmatpush.msra.mxu0 0.0
    %1770 = vmatpush.msra.mxu0 0.0
    %1771 = vmatpush.msra.mxu0 0.0
    %1772 = vmatpush.msra.mxu0 0.0
    %1773 = vmatpush.msra.mxu0 0.0
    %1774 = vmatpush.msra.mxu0 0.0
    %1775 = vmatpush.msra.mxu0 0.0
    %1776 = vmatpush.msra.mxu0 0.0
    %1777 = vmatpush.msra.mxu0 0.0
    %1778 = vmatpush.msra.mxu0 0.0
    %1779 = vmatpush.msra.mxu0 0.0
    %1780 = vmatpush.msra.mxu0 0.0
    %1781 = vmatpush.msra.mxu0 0.0
    %1782 = vmatpush.msra.mxu0 0.0
    %1783 = vmatpush.msra.mxu0 %v1385
    %1784 = vmatmul.f32.gmra.mxu0 %v1766
    %v1785 = vpop.f32.mrf.mxu0
    %v1786 = vadd.f32 0.0, %v1785
    %1787 = vdwg.mxu0
    %v1789 = vsel %vm469, %v1692, 0
    %1791 = vmatpush.msra.mxu0 0.0
    %1792 = vmatpush.msra.mxu0 0.0
    %1793 = vmatpush.msra.mxu0 0.0
    %1794 = vmatpush.msra.mxu0 0.0
    %1795 = vmatpush.msra.mxu0 0.0
    %1796 = vmatpush.msra.mxu0 0.0
    %1797 = vmatpush.msra.mxu0 0.0
    %1798 = vmatpush.msra.mxu0 0.0
    %1799 = vmatpush.msra.mxu0 0.0
    %1800 = vmatpush.msra.mxu0 0.0
    %1801 = vmatpush.msra.mxu0 0.0
    %1802 = vmatpush.msra.mxu0 0.0
    %1803 = vmatpush.msra.mxu0 0.0
    %1804 = vmatpush.msra.mxu0 0.0
    %1805 = vmatpush.msra.mxu0 0.0
    %1806 = vmatpush.msra.mxu0 %v1389
    %1807 = vmatmul.f32.gmra.mxu0 %v1789
    %v1808 = vpop.f32.mrf.mxu0
    %v1809 = vadd.f32 0.0, %v1808
    %1810 = vdwg.mxu0
    %v1812 = vsel %vm469, %v1693, 0
    %1814 = vmatpush.msra.mxu0 0.0
    %1815 = vmatpush.msra.mxu0 0.0
    %1816 = vmatpush.msra.mxu0 0.0
    %1817 = vmatpush.msra.mxu0 0.0
    %1818 = vmatpush.msra.mxu0 0.0
    %1819 = vmatpush.msra.mxu0 0.0
    %1820 = vmatpush.msra.mxu0 0.0
    %1821 = vmatpush.msra.mxu0 0.0
    %1822 = vmatpush.msra.mxu0 0.0
    %1823 = vmatpush.msra.mxu0 0.0
    %1824 = vmatpush.msra.mxu0 0.0
    %1825 = vmatpush.msra.mxu0 0.0
    %1826 = vmatpush.msra.mxu0 0.0
    %1827 = vmatpush.msra.mxu0 0.0
    %1828 = vmatpush.msra.mxu0 0.0
    %1829 = vmatpush.msra.mxu0 %v1391
    %1830 = vmatmul.f32.gmra.mxu0 %v1812
    %v1831 = vpop.f32.mrf.mxu0
    %v1832 = vadd.f32 0.0, %v1831
    %1833 = vdwg.mxu0
    %v1835 = vsel %vm469, %v1694, 0
    %1837 = vmatpush.msra.mxu0 0.0
    %1838 = vmatpush.msra.mxu0 0.0
    %1839 = vmatpush.msra.mxu0 0.0
    %1840 = vmatpush.msra.mxu0 0.0
    %1841 = vmatpush.msra.mxu0 0.0
    %1842 = vmatpush.msra.mxu0 0.0
    %1843 = vmatpush.msra.mxu0 0.0
    %1844 = vmatpush.msra.mxu0 0.0
    %1845 = vmatpush.msra.mxu0 0.0
    %1846 = vmatpush.msra.mxu0 0.0
    %1847 = vmatpush.msra.mxu0 0.0
    %1848 = vmatpush.msra.mxu0 0.0
    %1849 = vmatpush.msra.mxu0 0.0
    %1850 = vmatpush.msra.mxu0 0.0
    %1851 = vmatpush.msra.mxu0 0.0
    %1852 = vmatpush.msra.mxu0 %v1395
    %1853 = vmatmul.f32.gmra.mxu0 %v1835
    %v1854 = vpop.f32.mrf.mxu0
    %v1855 = vadd.f32 0.0, %v1854
    %1856 = vdwg.mxu0
    %v1858 = vsel %vm469, %v1695, 0
    %1860 = vmatpush.msra.mxu0 0.0
    %1861 = vmatpush.msra.mxu0 0.0
    %1862 = vmatpush.msra.mxu0 0.0
    %1863 = vmatpush.msra.mxu0 0.0
    %1864 = vmatpush.msra.mxu0 0.0
    %1865 = vmatpush.msra.mxu0 0.0
    %1866 = vmatpush.msra.mxu0 0.0
    %1867 = vmatpush.msra.mxu0 0.0
    %1868 = vmatpush.msra.mxu0 0.0
    %1869 = vmatpush.msra.mxu0 0.0
    %1870 = vmatpush.msra.mxu0 0.0
    %1871 = vmatpush.msra.mxu0 0.0
    %1872 = vmatpush.msra.mxu0 0.0
    %1873 = vmatpush.msra.mxu0 0.0
    %1874 = vmatpush.msra.mxu0 0.0
    %1875 = vmatpush.msra.mxu0 %v1397
    %1876 = vmatmul.f32.gmra.mxu0 %v1858
    %v1877 = vpop.f32.mrf.mxu0
    %v1878 = vadd.f32 0.0, %v1877
    %1879 = vdwg.mxu0
    %1882 = vrot.lane.b32.xlu0 %v1763, 8
    %v1883 = vpop.permute.xlu0 %1882
    %1884 = vrot.lane.b32.xlu0 %v1786, 8
    %v1885 = vpop.permute.xlu0 %1884
    %1890 = vrot.lane.b32.xlu0 %v1809, 16
    %v1891 = vpop.permute.xlu0 %1890
    %1892 = vrot.lane.b32.xlu0 %v1832, 16
    %v1893 = vpop.permute.xlu0 %1892
    %1898 = vrot.lane.b32.xlu0 %v1855, 24
    %v1899 = vpop.permute.xlu0 %1898
    %1900 = vrot.lane.b32.xlu0 %v1878, 24
    %v1901 = vpop.permute.xlu0 %1900
    %v1904 = vsel %vm469, %v1717, %v1883
    %v1905 = vsel %vm469, %v1740, %v1885
    %v1906 = vsel %vm992, %v1904, %v1891
    %v1907 = vsel %vm992, %v1905, %v1893
    %v1908 = vsel %vm995, %v1906, %v1899
    %v1909 = vsel %vm995, %v1907, %v1901
    %s1910 = scalar_lea.vmem [#allocation7], 32
    %v1911 = vld [vmem:[%s1910] sm:$0xff]
    %v1912 = vld [vmem:[%s1910 + $0x8] sm:$0xff]
    %v1913 = vld [vmem:[%s1910 + $0x10] sm:$0xff]
    %v1914 = vld [vmem:[%s1910 + $0x18] sm:$0xff]
    %s1915 = scalar_lea.vmem %s14, 1
    %v1916 = vld [vmem:[%s1915] sm:$0x1]
    %v1918 = vperm.slane %v1916, 0
    %v1921 = vsel %vm236, %v1908, 0
    %v1924 = vsel %vm236, %v1909, 0
    %1926 = vmatpush.msra.mxu0 0.0
    %1927 = vmatpush.msra.mxu0 0.0
    %1928 = vmatpush.msra.mxu0 0.0
    %1929 = vmatpush.msra.mxu0 0.0
    %1930 = vmatpush.msra.mxu0 0.0
    %1931 = vmatpush.msra.mxu0 0.0
    %1932 = vmatpush.msra.mxu0 0.0
    %1933 = vmatpush.msra.mxu0 0.0
    %1934 = vmatpush.msra.mxu0 0.0
    %1935 = vmatpush.msra.mxu0 0.0
    %1936 = vmatpush.msra.mxu0 0.0
    %1937 = vmatpush.msra.mxu0 0.0
    %1938 = vmatpush.msra.mxu0 %v1914
    %1939 = vmatpush.msra.mxu0 %v1913
    %1940 = vmatpush.msra.mxu0 %v1912
    %1941 = vmatpush.msra.mxu0 %v1911
    %1942 = vmatmul.f32.gmra.mxu0 %v1921
    %v1943 = vpop.f32.mrf.mxu0
    %v1944 = vadd.f32 %v1918, %v1943
    %1945 = vmatmul.f32.gmra.mxu0 %v1924
    %v1946 = vpop.f32.mrf.mxu0
    %v1947 = vadd.f32 %v1918, %v1946
    %1948 = vdwg.mxu0
    %v1949 = vadd.f32 %v1245, %v1944
    %v1950 = vadd.f32 %v1246, %v1947
    %s1951 = scalar_lea.vmem [#allocation8], 1
    %v1952 = vld [vmem:[%s1951] sm:$0x1]
    %s1953 = scalar_lea.vmem %s16, 1
    %v1954 = vld [vmem:[%s1953] sm:$0x1]
    %v1955 = vsel %vm236, %v1949, 0.0
    %1956 = vadd.xlane.f32.xlu0 %v1955
    %v1957 = vpop.xlane.xlu0 %1956
    %v1958 = vsel %vm236, %v1950, 0.0
    %1959 = vadd.xlane.f32.xlu0 %v1958
    %v1960 = vpop.xlane.xlu0 %1959
    %v1961 = vmul.f32 %v1957, %v249
    %v1962 = vmul.f32 %v1960, %v249
    %v1963 = vsub.f32 %v1949, %v1961
    %v1964 = vsub.f32 %v1950, %v1962
    %v1965 = vmul.f32 %v1963, %v1963
    %v1966 = vmul.f32 %v1964, %v1964
    %v1967 = vsel %vm236, %v1965, 0.0
    %1968 = vadd.xlane.f32.xlu0 %v1967
    %v1969 = vpop.xlane.xlu0 %1968
    %v1970 = vsel %vm236, %v1966, 0.0
    %1971 = vadd.xlane.f32.xlu0 %v1970
    %v1972 = vpop.xlane.xlu0 %1971
    %v1973 = vmul.f32 %v1969, %v249
    %v1974 = vmul.f32 %v1972, %v249
    %v1975 = vadd.f32 %v1973, 1e-12
    %v1976 = vadd.f32 %v1974, 1e-12
    %v1977 = vrsqrt.pop %v1975
    %v1978 = vmul.f32 %v1977, %v1975
    %v1979 = vmul.f32 %v1978, %v1977
    %v1980 = vmul.f32 0.5, %v1979
    %v1981 = vsub.f32 1.5, %v1980
    %v1982 = vmul.f32 %v1977, %v1981
    %vm1983 = vweird.f32 %v1975
    %vm1984 = vweird.f32 %v1977
    %vm1985 = vmor %vm1983, %vm1984
    %v1986 = vsel %vm1985, %v1977, %v1982
    %v1987 = vrsqrt.pop %v1976
    %v1988 = vmul.f32 %v1987, %v1976
    %v1989 = vmul.f32 %v1988, %v1987
    %v1990 = vmul.f32 0.5, %v1989
    %v1991 = vsub.f32 1.5, %v1990
    %v1992 = vmul.f32 %v1987, %v1991
    %vm1993 = vweird.f32 %v1976
    %vm1994 = vweird.f32 %v1987
    %vm1995 = vmor %vm1993, %vm1994
    %v1996 = vsel %vm1995, %v1987, %v1992
    %v1997 = vmul.f32 %v1963, %v1986
    %v1998 = vmul.f32 %v1964, %v1996
    %v2000 = vperm.slane %v1952, 0
    %v2002 = vmul.f32 %v1997, %v2000
    %v2003 = vmul.f32 %v1998, %v2000
    %v2005 = vperm.slane %v1954, 0
    %v2007 = vadd.f32 %v2002, %v2005
    %v2008 = vadd.f32 %v2003, %v2005
    %s2009 = scalar_lea.vmem [#allocation10], 32
    %v2010 = vld [vmem:[%s2009] sm:$0xff]
    %v2011 = vld [vmem:[%s2009 + $0x8] sm:$0xff]
    %v2012 = vld [vmem:[%s2009 + $0x10] sm:$0xff]
    %v2013 = vld [vmem:[%s2009 + $0x18] sm:$0xff]
    %s2014 = scalar_lea.vmem %s18, 1
    %v2015 = vld [vmem:[%s2014] sm:$0x1]
    %v2017 = vperm.slane %v2015, 0
    %v2020 = vsel %vm236, %v2007, 0
    %v2023 = vsel %vm236, %v2008, 0
    %2025 = vmatpush.msra.mxu0 0.0
    %2026 = vmatpush.msra.mxu0 0.0
    %2027 = vmatpush.msra.mxu0 0.0
    %2028 = vmatpush.msra.mxu0 0.0
    %2029 = vmatpush.msra.mxu0 0.0
    %2030 = vmatpush.msra.mxu0 0.0
    %2031 = vmatpush.msra.mxu0 0.0
    %2032 = vmatpush.msra.mxu0 0.0
    %2033 = vmatpush.msra.mxu0 0.0
    %2034 = vmatpush.msra.mxu0 0.0
    %2035 = vmatpush.msra.mxu0 0.0
    %2036 = vmatpush.msra.mxu0 0.0
    %2037 = vmatpush.msra.mxu0 %v2013
    %2038 = vmatpush.msra.mxu0 %v2012
    %2039 = vmatpush.msra.mxu0 %v2011
    %2040 = vmatpush.msra.mxu0 %v2010
    %2041 = vmatmul.f32.gmra.mxu0 %v2020
    %v2042 = vpop.f32.mrf.mxu0
    %v2043 = vadd.f32 %v2017, %v2042
    %2044 = vmatmul.f32.gmra.mxu0 %v2023
    %v2045 = vpop.f32.mrf.mxu0
    %v2046 = vadd.f32 %v2017, %v2045
    %2047 = vdwg.mxu0
    %v2048 = vmul.f32 %v2043, %v2043
    %v2049 = vmul.f32 %v2046, %v2046
    %v2050 = vmul.f32 %v2043, %v2048
    %v2051 = vmul.f32 %v2046, %v2049
    %v2052 = vmul.f32 %v2050, 0.044715
    %v2053 = vmul.f32 %v2051, 0.044715
    %v2054 = vadd.f32 %v2043, %v2052
    %v2055 = vadd.f32 %v2046, %v2053
    %v2056 = vmul.f32 %v2054, 0.7978846
    %v2057 = vmul.f32 %v2055, 0.7978846
    %v2058 = vtanh.pop %v2056
    %v2059 = vtanh.pop %v2057
    %v2060 = vadd.f32 %v2058, 1.0
    %v2061 = vadd.f32 %v2059, 1.0
    %v2062 = vmul.f32 %v2060, 0.5
    %v2063 = vmul.f32 %v2061, 0.5
    %v2064 = vmul.f32 %v2043, %v2062
    %v2065 = vmul.f32 %v2046, %v2063
    %s2066 = scalar_lea.vmem %s19, 64
    %v2067 = vld [vmem:[%s2066] sm:$0xff]
    %v2068 = vld [vmem:[%s2066 + $0x8] sm:$0xff]
    %v2069 = vld [vmem:[%s2066 + $0x10] sm:$0xff]
    %v2070 = vld [vmem:[%s2066 + $0x18] sm:$0xff]
    %v2071 = vld [vmem:[%s2066 + $0x20] sm:$0xff]
    %v2072 = vld [vmem:[%s2066 + $0x28] sm:$0xff]
    %v2073 = vld [vmem:[%s2066 + $0x30] sm:$0xff]
    %v2074 = vld [vmem:[%s2066 + $0x38] sm:$0xff]
    %s2075 = scalar_lea.vmem %s20, 1
    %v2076 = vld [vmem:[%s2075] sm:$0x1]
    %v2078 = vperm.slane %v2076, 0
    %v2081 = vsel %vm201, %v2064, 0
    %v2084 = vsel %vm201, %v2065, 0
    %2086 = vmatpush.msra.mxu0 0.0
    %2087 = vmatpush.msra.mxu0 0.0
    %2088 = vmatpush.msra.mxu0 0.0
    %2089 = vmatpush.msra.mxu0 0.0
    %2090 = vmatpush.msra.mxu0 0.0
    %2091 = vmatpush.msra.mxu0 0.0
    %2092 = vmatpush.msra.mxu0 0.0
    %2093 = vmatpush.msra.mxu0 0.0
    %2094 = vmatpush.msra.mxu0 %v2074
    %2095 = vmatpush.msra.mxu0 %v2073
    %2096 = vmatpush.msra.mxu0 %v2072
    %2097 = vmatpush.msra.mxu0 %v2071
    %2098 = vmatpush.msra.mxu0 %v2070
    %2099 = vmatpush.msra.mxu0 %v2069
    %2100 = vmatpush.msra.mxu0 %v2068
    %2101 = vmatpush.msra.mxu0 %v2067
    %2102 = vmatmul.f32.gmra.mxu0 %v2081
    %v2103 = vpop.f32.mrf.mxu0
    %v2104 = vadd.f32 %v2078, %v2103
    %2105 = vmatmul.f32.gmra.mxu0 %v2084
    %v2106 = vpop.f32.mrf.mxu0
    %v2107 = vadd.f32 %v2078, %v2106
    %2108 = vdwg.mxu0
    %v2109 = vadd.f32 %v2007, %v2104
    %v2110 = vadd.f32 %v2008, %v2107
    %s2111 = scalar_lea.vmem %s21, 1
    %v2112 = vld [vmem:[%s2111] sm:$0x1]
    %s2113 = scalar_lea.vmem [#allocation11], 1
    %v2114 = vld [vmem:[%s2113] sm:$0x1]
    %v2115 = vsel %vm236, %v2109, 0.0
    %2116 = vadd.xlane.f32.xlu0 %v2115
    %v2117 = vpop.xlane.xlu0 %2116
    %v2118 = vsel %vm236, %v2110, 0.0
    %2119 = vadd.xlane.f32.xlu0 %v2118
    %v2120 = vpop.xlane.xlu0 %2119
    %v2121 = vmul.f32 %v2117, %v249
    %v2122 = vmul.f32 %v2120, %v249
    %v2123 = vsub.f32 %v2109, %v2121
    %v2124 = vsub.f32 %v2110, %v2122
    %v2125 = vmul.f32 %v2123, %v2123
    %v2126 = vmul.f32 %v2124, %v2124
    %v2127 = vsel %vm236, %v2125, 0.0
    %2128 = vadd.xlane.f32.xlu0 %v2127
    %v2129 = vpop.xlane.xlu0 %2128
    %v2130 = vsel %vm236, %v2126, 0.0
    %2131 = vadd.xlane.f32.xlu0 %v2130
    %v2132 = vpop.xlane.xlu0 %2131
    %v2133 = vmul.f32 %v2129, %v249
    %v2134 = vmul.f32 %v2132, %v249
    %v2135 = vadd.f32 %v2133, 1e-12
    %v2136 = vadd.f32 %v2134, 1e-12
    %v2137 = vrsqrt.pop %v2135
    %v2138 = vmul.f32 %v2137, %v2135
    %v2139 = vmul.f32 %v2138, %v2137
    %v2140 = vmul.f32 0.5, %v2139
    %v2141 = vsub.f32 1.5, %v2140
    %v2142 = vmul.f32 %v2137, %v2141
    %vm2143 = vweird.f32 %v2135
    %vm2144 = vweird.f32 %v2137
    %vm2145 = vmor %vm2143, %vm2144
    %v2146 = vsel %vm2145, %v2137, %v2142
    %v2147 = vrsqrt.pop %v2136
    %v2148 = vmul.f32 %v2147, %v2136
    %v2149 = vmul.f32 %v2148, %v2147
    %v2150 = vmul.f32 0.5, %v2149
    %v2151 = vsub.f32 1.5, %v2150
    %v2152 = vmul.f32 %v2147, %v2151
    %vm2153 = vweird.f32 %v2136
    %vm2154 = vweird.f32 %v2147
    %vm2155 = vmor %vm2153, %vm2154
    %v2156 = vsel %vm2155, %v2147, %v2152
    %v2157 = vmul.f32 %v2123, %v2146
    %v2158 = vmul.f32 %v2124, %v2156
    %v2160 = vperm.slane %v2112, 0
    %v2162 = vmul.f32 %v2157, %v2160
    %v2163 = vmul.f32 %v2158, %v2160
    %v2165 = vperm.slane %v2114, 0
    %v2167 = vadd.f32 %v2162, %v2165
    %v2168 = vadd.f32 %v2163, %v2165
    %v2169 = vld [vmem:[%s23] sm:$0xff]
    %v2170 = vld [vmem:[%s23 + $0x8] sm:$0xff]
    %v2171 = vld [vmem:[%s23 + $0x10] sm:$0xff]
    %v2172 = vld [vmem:[%s23 + $0x18] sm:$0xff]
    %v2173 = vld [vmem:[%s24] sm:$0x1]
    %v2175 = vperm.slane %v2173, 0
    %v2179 = vrot.slane %v2168, 7
    %vm2180 = vcmask 1041409
    %v2181 = vsel %vm2180, %v2179, %v2167
    %v2182 = vsel %vm236, %v2181, 0
    %2184 = vmatpush.msra.mxu0 0.0
    %2185 = vmatpush.msra.mxu0 0.0
    %2186 = vmatpush.msra.mxu0 0.0
    %2187 = vmatpush.msra.mxu0 0.0
    %2188 = vmatpush.msra.mxu0 0.0
    %2189 = vmatpush.msra.mxu0 0.0
    %2190 = vmatpush.msra.mxu0 0.0
    %2191 = vmatpush.msra.mxu0 0.0
    %2192 = vmatpush.msra.mxu0 0.0
    %2193 = vmatpush.msra.mxu0 0.0
    %2194 = vmatpush.msra.mxu0 0.0
    %2195 = vmatpush.msra.mxu0 0.0
    %2196 = vmatpush.msra.mxu0 %v2172
    %2197 = vmatpush.msra.mxu0 %v2171
    %2198 = vmatpush.msra.mxu0 %v2170
    %2199 = vmatpush.msra.mxu0 %v2169
    %2200 = vmatmul.f32.gmra.mxu0 %v2182
    %v2201 = vpop.f32.mrf.mxu0
    %v2202 = vadd.f32 %v2175, %v2201
    %2203 = vdwg.mxu0
    %v2204 = vtanh.pop %v2202
    %v2205 = vld [vmem:[%s25] sm:$0xff]
    %v2206 = vld [vmem:[%s25 + $0x8] sm:$0xff]
    %v2207 = vld [vmem:[%s25 + $0x10] sm:$0xff]
    %v2208 = vld [vmem:[%s25 + $0x18] sm:$0xff]
    %v2209 = vld [vmem:[%s26] sm:$0x1]
    %v2211 = vperm.slane %v2209, 0
    %v2214 = vsel %vm236, %v2204, 0
    %2216 = vmatpush.msra.mxu0 0.0
    %2217 = vmatpush.msra.mxu0 0.0
    %2218 = vmatpush.msra.mxu0 0.0
    %2219 = vmatpush.msra.mxu0 0.0
    %2220 = vmatpush.msra.mxu0 0.0
    %2221 = vmatpush.msra.mxu0 0.0
    %2222 = vmatpush.msra.mxu0 0.0
    %2223 = vmatpush.msra.mxu0 0.0
    %2224 = vmatpush.msra.mxu0 0.0
    %2225 = vmatpush.msra.mxu0 0.0
    %2226 = vmatpush.msra.mxu0 0.0
    %2227 = vmatpush.msra.mxu0 0.0
    %2228 = vmatpush.msra.mxu0 %v2208
    %2229 = vmatpush.msra.mxu0 %v2207
    %2230 = vmatpush.msra.mxu0 %v2206
    %2231 = vmatpush.msra.mxu0 %v2205
    %2232 = vmatmul.f32.gmra.mxu0 %v2214
    %v2233 = vpop.f32.mrf.mxu0
    %v2234 = vadd.f32 %v2211, %v2233
    %2235 = vdwg.mxu0
    %vm2236 = vcmask 9216
    %2237 = vst.msk [vmem:[#allocation13] sm:$0x3] %vm2236, %v2234
    // Predicated region
    $region134: #{tpu_custom_call.1} parent=1 // pred_check
      _
    $region135: #{tpu_custom_call.1} parent=1 // pred_check_branch
      %2239 = sbr.rel (0) target = $region137
    $region136: #{tpu_custom_call.1} parent=1 // pred_region
      %2241 = vsyncadd [#allocation4], 0
      %s2243 = sshll.u32 [#allocation13], 4
      %s2244 = int_to_ptr.vmem [resolvable:$true] %s2243
      %s2245 = sshll.u32 %s27, 4
      %s2246 = int_to_ptr.hbm [resolvable:$true] %s2245
      %2248 = dma.vmem_to_hbm [thread:$0]  %s2244, 32, %s2246, [#allocation4]
    $region137: #{tpu_custom_call.1} parent=1 // pred_fallthru
      _
    // Predicated region
    $region138: #{tpu_custom_call.1} parent=1 // pred_check
      _
    $region139: #{tpu_custom_call.1} parent=1 // pred_check_branch
      %2250 = sbr.rel (0) target = $region141
    $region140: #{tpu_custom_call.1} parent=1 // pred_region
      %2252 = dma.done [#allocation4], 32
    $region141: #{tpu_custom_call.1} parent=1 // pred_fallthru
      _
    %2253 = vsyncpa [#allocation3], 1
    %2254 = vsyncpa [#allocation6], 1
    %2255 = vsyncpa [#allocation9], 1
    %2256 = vsyncpa [#allocation12], 1
    %2257 = vsyncpa [#allocation4], 1

</llo_original>
